<compile_context>
chip_gen: v7x
topology: tpu7x:2x2x1
jax: 0.10.0
libtpu: 0.0.40
codegen_flags: <defaults>
</compile_context>

<pallas_src>
from functools import partial

import jax
import jax.numpy as jnp
from jax.experimental import pallas as pl
from jax.experimental.pallas import tpu as pltpu


def _cdiv(a, b):
    return (a + b - 1) // b


def _round_up(x, m):
    return ((x + m - 1) // m) * m


def _make_kernel(num_features, architecture, *, tile_b, rows_per_set,
                 num_row_tiles, n_points, pad_per_set, multi_tile):
    """Builds the kernel body.  All sizes are compile-time Python ints."""
    dims = [num_features] + list(architecture)
    n_layers = len(dims) - 1
    c_last = dims[-1]
    inv_n = 1.0 / float(n_points)

    # Flat SMEM parameter layout: w1, b1, ..., wL, bL, wh, bh (f32 scalars).
    w_off, b_off = [], []
    off = 0
    for li in range(n_layers):
        w_off.append(off)
        off += dims[li] * dims[li + 1]
        b_off.append(off)
        off += dims[li + 1]
    wh_off = off
    off += c_last
    bh_off = off
    off += 1
    n_scalars = off

    def kernel(x_ref, p_ref, pred_ref, *scratch):
        # Load every weight/bias scalar from SMEM exactly once; the traced
        # values are reused across all unrolled FMA chains below.
        pv = [p_ref[k] for k in range(n_scalars)]

        def w(li, i, o):
            return pv[w_off[li] + i * dims[li + 1] + o]

        def b(li, o):
            return pv[b_off[li] + o]

        def sigmoid(a):
            # 1 / (1 + exp(-a)); exp and the reciprocal run on the EUP slot.
            return pl.reciprocal(1.0 + jnp.exp(-a), approx=False)

        def leaf_mlp(acts):
            # Tiny rFF as unrolled VPU broadcast-FMAs (never drives the MXU
            # with >95%-padded tiles).  acts: list of F same-shaped f32 slabs.
            for li in range(n_layers):
                nxt = []
                for o in range(dims[li + 1]):
                    h = acts[0] * w(li, 0, o)
                    for i in range(1, dims[li]):
                        h = h + acts[i] * w(li, i, o)
                    h = h + b(li, o)
                    if li < n_layers - 1:
                        h = jnp.maximum(h, 0.0)
                    nxt.append(h)
                acts = nxt
            return [sigmoid(a) for a in acts]

        def zero_leaf():
            # Leaf value of an all-zero (padded) point, computed with the very
            # same op chain as the padded slab entries, so the pad correction
            # in head() cancels them exactly.  (1,1) arrays per channel.
            if pad_per_set == 0:
                return None
            return leaf_mlp([jnp.zeros((1, 1), jnp.float32)] * num_features)

        def head(sums, zl):
            # sums[c]: (1,1) sum of leaf_c over the set's padded point slots.
            logit = jnp.zeros((1, 1), jnp.float32) + pv[bh_off]
            for c in range(c_last):
                s = sums[c]
                if pad_per_set:
                    s = s - float(pad_per_set) * zl[c]
                logit = logit + s * inv_n * pv[wh_off + c]
            return sigmoid(logit)

        if multi_tile:
            # Large-N path: stream row tiles of one point set, accumulate the
            # leaf slabs in VMEM, reduce + head only at the last tile.
            acc_ref = scratch[0]
            j = pl.program_id(1)

            @pl.when(j == 0)
            def _init():
                acc_ref[...] = jnp.zeros_like(acc_ref)

            leaf = leaf_mlp(
                [x_ref[f, 0].astype(jnp.float32) for f in range(num_features)])
            for c in range(c_last):
                acc_ref[c, :, :] = acc_ref[c, :, :] + leaf[c]

            @pl.when(j == num_row_tiles - 1)
            def _finalize():
                zl = zero_leaf()
                sums = []
                for c in range(c_last):
                    s = jnp.sum(acc_ref[c, :, :], axis=1, keepdims=True)
                    sums.append(jnp.sum(s, axis=0, keepdims=True))
                pred_ref[...] = jnp.broadcast_to(head(sums, zl), pred_ref.shape)
        else:
            # Small/medium-N path: `tile_b` point sets are folded into the
            # sublane axis of one dense slab, so the MLP runs once per grid
            # step at full vreg occupancy; only the cheap per-set pooling is
            # unrolled over the folded sets.
            leaf = leaf_mlp(
                [x_ref[f, 0].astype(jnp.float32) for f in range(num_features)])
            lane_sums = [jnp.sum(lf, axis=1, keepdims=True) for lf in leaf]
            zl = zero_leaf()
            for lb in range(tile_b):
                lo = lb * rows_per_set
                hi = lo + rows_per_set
                sums = [jnp.sum(lane_sums[c][lo:hi, :], axis=0, keepdims=True)
                        for c in range(c_last)]
                pred_ref[0, lb:lb + 1, :] = jnp.broadcast_to(
                    head(sums, zl), (1, 128))

    return kernel, n_scalars


@partial(jax.jit, static_argnames=("architecture", "max_rows_per_step",
                                   "max_sets_per_step", "input_dtype"))
def pointset_forward(x, params, *, architecture=(8, 4, 2),
                     max_rows_per_step=512, max_sets_per_step=64,
                     input_dtype=jnp.bfloat16):
    """PointSetNN forward.  x: (B, N, F) -> (B, 1) predictions."""
    B, N, F = x.shape
    architecture = tuple(architecture)
    c_last = architecture[-1]

    # ---- tiling -------------------------------------------------------------
    R = _cdiv(N, 128)                          # 128-lane rows per point set
    if R <= max_rows_per_step:
        # One row tile per set; fold several sets into the sublane axis of a
        # single grid step (fills vregs, amortises ~0.35us/step overhead).
        multi_tile = False
        num_row_tiles = 1
        tile_b = max(1, min(B, max_rows_per_step // R, max_sets_per_step))
        rows_per_set = R
        block_rows = tile_b * R
    else:
        # Large sets: stream up to max_rows_per_step*128 points per step and
        # accumulate partial leaf slabs in VMEM.
        multi_tile = True
        tile_b = 1
        num_row_tiles = _cdiv(R, max_rows_per_step)
        block_rows = _round_up(_cdiv(R, num_row_tiles), 8)
        rows_per_set = block_rows * num_row_tiles
    B_pad = _round_up(B, tile_b)
    n_set_tiles = B_pad // tile_b
    group_rows = tile_b * rows_per_set
    pad_per_set = rows_per_set * 128 - N

    # ---- ingest layout ------------------------------------------------------
    # (F, n_set_tiles, group_rows, 128): the big point axis sits on the
    # lane/sublane axes, channels on the tiny leading axis.  bf16 by default
    # (halves HBM read traffic); cast/transpose/pad/reshape fuse into a single
    # HBM copy under jit.  Callers that reuse X across calls should cache it.
    x_t = jnp.transpose(x.astype(input_dtype), (2, 0, 1))          # (F, B, N)
    x_t = jnp.pad(x_t, ((0, 0), (0, B_pad - B), (0, rows_per_set * 128 - N)))
    x_t = x_t.reshape(F, n_set_tiles, group_rows, 128)

    # One flat f32 SMEM vector for all weights/biases (a 1-D SMEM buffer
    # avoids the 8x128-word padding of per-array 2-D SMEM blocks).
    flat = []
    for i in range(len(architecture)):
        flat.append(params[f"w{i + 1}"].reshape(-1))
        flat.append(params[f"b{i + 1}"].reshape(-1))
    flat.append(params["wh"].reshape(-1))
    flat.append(params["bh"].reshape(-1))
    p_vec = jnp.concatenate(flat).astype(jnp.float32)

    kernel, n_scalars = _make_kernel(
        F, architecture, tile_b=tile_b, rows_per_set=rows_per_set,
        num_row_tiles=num_row_tiles, n_points=N, pad_per_set=pad_per_set,
        multi_tile=multi_tile)
    assert p_vec.shape[0] == n_scalars

    x_spec = pl.BlockSpec((F, 1, block_rows, 128), lambda bi, j: (0, bi, j, 0))
    p_spec = pl.BlockSpec(memory_space=pltpu.MemorySpace.SMEM)
    out_spec = pl.BlockSpec((1, tile_b, 128), lambda bi, j: (bi, 0, 0))

    scratch = []
    if multi_tile:
        scratch.append(pltpu.VMEM((c_last, block_rows, 128), jnp.float32))

    # Explicit VMEM ceiling: well above what the <=~2 MB blocks need, capped at
    # 48 MiB so the same config stays safe on v7x (64 MiB physical VMEM).
    x_block_bytes = F * block_rows * 128 * jnp.dtype(input_dtype).itemsize
    acc_bytes = c_last * block_rows * 128 * 4 if multi_tile else 0
    vmem_limit = int(min(48 * 1024 * 1024,
                         max(32 * 1024 * 1024,
                             4 * x_block_bytes + 2 * acc_bytes)))

    out = pl.pallas_call(
        kernel,
        out_shape=jax.ShapeDtypeStruct((n_set_tiles, tile_b, 128), jnp.float32),
        grid=(n_set_tiles, num_row_tiles),
        in_specs=[x_spec, p_spec],
        out_specs=out_spec,
        scratch_shapes=scratch,
        compiler_params=pltpu.CompilerParams(
            dimension_semantics=("parallel", "arbitrary"),
            vmem_limit_bytes=vmem_limit,
        ),
    )(x_t, p_vec)

    return out.reshape(B_pad, 128)[:B, :1]                         # (B, 1)


def init_params(key, num_features, architecture=(8, 4, 2)):
    """torch.nn.Linear-style U(-1/sqrt(fan_in), +1/sqrt(fan_in)) init.

    Weights stored (in, out) — transpose of PyTorch's (out, in); biases (1, out).
    """
    dims = [num_features] + list(architecture) + [1]      # F -> 8 -> 4 -> 2 -> 1
    names = [str(i + 1) for i in range(len(architecture))] + ["h"]
    params = {}
    keys = jax.random.split(key, 2 * len(names))
    for i, name in enumerate(names):
        fan_in, fan_out = dims[i], dims[i + 1]
        bound = 1.0 / jnp.sqrt(jnp.float32(fan_in))
        params[f"w{name}"] = jax.random.uniform(
            keys[2 * i], (fan_in, fan_out), jnp.float32, -bound, bound)
        params[f"b{name}"] = jax.random.uniform(
            keys[2 * i + 1], (1, fan_out), jnp.float32, -bound, bound)
    return params


def reference_forward(x, params, architecture=(8, 4, 2)):
    """Pure-JAX reference mirroring the PyTorch forward (full f32 precision)."""
    hp = jax.lax.Precision.HIGHEST
    h = x.astype(jnp.float32)
    n_layers = len(architecture)
    for i in range(n_layers):
        h = jnp.einsum("...i,io->...o", h, params[f"w{i + 1}"],
                       precision=hp) + params[f"b{i + 1}"]
        if i < n_layers - 1:
            h = jnp.maximum(h, 0.0)
    leaf = jax.nn.sigmoid(h)                               # (B, N, C_last)
    pooled = leaf.mean(axis=1)                             # (B, C_last)
    logit = jnp.einsum("bc,co->bo", pooled, params["wh"],
                       precision=hp) + params["bh"]
    return jax.nn.sigmoid(logit)                           # (B, 1)


if __name__ == "__main__":
    key = jax.random.PRNGKey(0)
    k_x, k_p, k_x2 = jax.random.split(key, 3)

    # Small shape consistent with the module: batch=2, set of 8 points, 4 feats.
    B, N, F = 2, 8, 4
    x = jax.random.normal(k_x, (B, N, F), jnp.float32)
    params = init_params(k_p, num_features=F, architecture=(8, 4, 2))

    # Default fast path: bf16 ingest (f32 accumulation in-kernel).
    pred = jax.block_until_ready(pointset_forward(x, params))
    # Exact path: f32 ingest.
    pred_f32 = jax.block_until_ready(
        pointset_forward(x, params, input_dtype=jnp.float32))

    ref = reference_forward(x, params)
    ref_bf16 = reference_forward(x.astype(jnp.bfloat16).astype(jnp.float32),
                                 params)

    assert pred.shape == (B, 1) and pred_f32.shape == (B, 1)
    assert jnp.allclose(pred_f32, ref, atol=2e-5, rtol=2e-5), (pred_f32, ref)
    assert jnp.allclose(pred, ref_bf16, atol=1e-4, rtol=1e-4), (pred, ref_bf16)
    # bf16 ingest vs. full-f32 reference: input-quantisation level only.
    assert jnp.allclose(pred, ref, atol=2e-2, rtol=2e-2), (pred, ref)

    # Also exercise the multi-row-tile streaming/accumulation path (small
    # row tiles forced via max_rows_per_step so the test stays small).
    N2 = 8000
    x2 = jax.random.normal(k_x2, (B, N2, F), jnp.float32)
    pred2 = jax.block_until_ready(
        pointset_forward(x2, params, max_rows_per_step=16))
    ref2_bf16 = reference_forward(x2.astype(jnp.bfloat16).astype(jnp.float32),
                                  params)
    assert pred2.shape == (B, 1)
    assert jnp.allclose(pred2, ref2_bf16, atol=1e-4, rtol=1e-4), (pred2,
                                                                  ref2_bf16)

    print("KERNEL_OK")
</pallas_src>

<mosaic_0001>
module attributes {stable_mosaic.version = 11 : i64} {
  func.func @kernel(%arg0: i32, %arg1: i32, %arg2: memref<4x1x2x128xbf16, #tpu.memory_space<vmem>>, %arg3: memref<89xf32, #tpu.memory_space<smem>>, %arg4: memref<1x2x128xf32, #tpu.memory_space<vmem>>) attributes {dimension_semantics = [#tpu.dimension_semantics<parallel>, #tpu.dimension_semantics<arbitrary>], iteration_bounds = array<i64: 1, 1>, scalar_prefetch = 0 : i64, scratch_operands = 0 : i64, tpu.core_type = #tpu.core_type<tc>, window_params = [{transform_indices = @transform_0, window_bounds = array<i64: 4, 1, 2, 128>}, {transform_indices = @transform_1, window_bounds = array<i64: 89>}, {transform_indices = @transform_2, window_bounds = array<i64: 1, 2, 128>}]} {
    %c0 = arith.constant 0 : index
    %0 = memref.load %arg3[%c0] : memref<89xf32, #tpu.memory_space<smem>>
    %c1 = arith.constant 1 : index
    %1 = memref.load %arg3[%c1] : memref<89xf32, #tpu.memory_space<smem>>
    %c2 = arith.constant 2 : index
    %2 = memref.load %arg3[%c2] : memref<89xf32, #tpu.memory_space<smem>>
    %c3 = arith.constant 3 : index
    %3 = memref.load %arg3[%c3] : memref<89xf32, #tpu.memory_space<smem>>
    %c4 = arith.constant 4 : index
    %4 = memref.load %arg3[%c4] : memref<89xf32, #tpu.memory_space<smem>>
    %c5 = arith.constant 5 : index
    %5 = memref.load %arg3[%c5] : memref<89xf32, #tpu.memory_space<smem>>
    %c6 = arith.constant 6 : index
    %6 = memref.load %arg3[%c6] : memref<89xf32, #tpu.memory_space<smem>>
    %c7 = arith.constant 7 : index
    %7 = memref.load %arg3[%c7] : memref<89xf32, #tpu.memory_space<smem>>
    %c8 = arith.constant 8 : index
    %8 = memref.load %arg3[%c8] : memref<89xf32, #tpu.memory_space<smem>>
    %c9 = arith.constant 9 : index
    %9 = memref.load %arg3[%c9] : memref<89xf32, #tpu.memory_space<smem>>
    %c10 = arith.constant 10 : index
    %10 = memref.load %arg3[%c10] : memref<89xf32, #tpu.memory_space<smem>>
    %c11 = arith.constant 11 : index
    %11 = memref.load %arg3[%c11] : memref<89xf32, #tpu.memory_space<smem>>
    %c12 = arith.constant 12 : index
    %12 = memref.load %arg3[%c12] : memref<89xf32, #tpu.memory_space<smem>>
    %c13 = arith.constant 13 : index
    %13 = memref.load %arg3[%c13] : memref<89xf32, #tpu.memory_space<smem>>
    %c14 = arith.constant 14 : index
    %14 = memref.load %arg3[%c14] : memref<89xf32, #tpu.memory_space<smem>>
    %c15 = arith.constant 15 : index
    %15 = memref.load %arg3[%c15] : memref<89xf32, #tpu.memory_space<smem>>
    %c16 = arith.constant 16 : index
    %16 = memref.load %arg3[%c16] : memref<89xf32, #tpu.memory_space<smem>>
    %c17 = arith.constant 17 : index
    %17 = memref.load %arg3[%c17] : memref<89xf32, #tpu.memory_space<smem>>
    %c18 = arith.constant 18 : index
    %18 = memref.load %arg3[%c18] : memref<89xf32, #tpu.memory_space<smem>>
    %c19 = arith.constant 19 : index
    %19 = memref.load %arg3[%c19] : memref<89xf32, #tpu.memory_space<smem>>
    %c20 = arith.constant 20 : index
    %20 = memref.load %arg3[%c20] : memref<89xf32, #tpu.memory_space<smem>>
    %c21 = arith.constant 21 : index
    %21 = memref.load %arg3[%c21] : memref<89xf32, #tpu.memory_space<smem>>
    %c22 = arith.constant 22 : index
    %22 = memref.load %arg3[%c22] : memref<89xf32, #tpu.memory_space<smem>>
    %c23 = arith.constant 23 : index
    %23 = memref.load %arg3[%c23] : memref<89xf32, #tpu.memory_space<smem>>
    %c24 = arith.constant 24 : index
    %24 = memref.load %arg3[%c24] : memref<89xf32, #tpu.memory_space<smem>>
    %c25 = arith.constant 25 : index
    %25 = memref.load %arg3[%c25] : memref<89xf32, #tpu.memory_space<smem>>
    %c26 = arith.constant 26 : index
    %26 = memref.load %arg3[%c26] : memref<89xf32, #tpu.memory_space<smem>>
    %c27 = arith.constant 27 : index
    %27 = memref.load %arg3[%c27] : memref<89xf32, #tpu.memory_space<smem>>
    %c28 = arith.constant 28 : index
    %28 = memref.load %arg3[%c28] : memref<89xf32, #tpu.memory_space<smem>>
    %c29 = arith.constant 29 : index
    %29 = memref.load %arg3[%c29] : memref<89xf32, #tpu.memory_space<smem>>
    %c30 = arith.constant 30 : index
    %30 = memref.load %arg3[%c30] : memref<89xf32, #tpu.memory_space<smem>>
    %c31 = arith.constant 31 : index
    %31 = memref.load %arg3[%c31] : memref<89xf32, #tpu.memory_space<smem>>
    %c32 = arith.constant 32 : index
    %32 = memref.load %arg3[%c32] : memref<89xf32, #tpu.memory_space<smem>>
    %c33 = arith.constant 33 : index
    %33 = memref.load %arg3[%c33] : memref<89xf32, #tpu.memory_space<smem>>
    %c34 = arith.constant 34 : index
    %34 = memref.load %arg3[%c34] : memref<89xf32, #tpu.memory_space<smem>>
    %c35 = arith.constant 35 : index
    %35 = memref.load %arg3[%c35] : memref<89xf32, #tpu.memory_space<smem>>
    %c36 = arith.constant 36 : index
    %36 = memref.load %arg3[%c36] : memref<89xf32, #tpu.memory_space<smem>>
    %c37 = arith.constant 37 : index
    %37 = memref.load %arg3[%c37] : memref<89xf32, #tpu.memory_space<smem>>
    %c38 = arith.constant 38 : index
    %38 = memref.load %arg3[%c38] : memref<89xf32, #tpu.memory_space<smem>>
    %c39 = arith.constant 39 : index
    %39 = memref.load %arg3[%c39] : memref<89xf32, #tpu.memory_space<smem>>
    %c40 = arith.constant 40 : index
    %40 = memref.load %arg3[%c40] : memref<89xf32, #tpu.memory_space<smem>>
    %c41 = arith.constant 41 : index
    %41 = memref.load %arg3[%c41] : memref<89xf32, #tpu.memory_space<smem>>
    %c42 = arith.constant 42 : index
    %42 = memref.load %arg3[%c42] : memref<89xf32, #tpu.memory_space<smem>>
    %c43 = arith.constant 43 : index
    %43 = memref.load %arg3[%c43] : memref<89xf32, #tpu.memory_space<smem>>
    %c44 = arith.constant 44 : index
    %44 = memref.load %arg3[%c44] : memref<89xf32, #tpu.memory_space<smem>>
    %c45 = arith.constant 45 : index
    %45 = memref.load %arg3[%c45] : memref<89xf32, #tpu.memory_space<smem>>
    %c46 = arith.constant 46 : index
    %46 = memref.load %arg3[%c46] : memref<89xf32, #tpu.memory_space<smem>>
    %c47 = arith.constant 47 : index
    %47 = memref.load %arg3[%c47] : memref<89xf32, #tpu.memory_space<smem>>
    %c48 = arith.constant 48 : index
    %48 = memref.load %arg3[%c48] : memref<89xf32, #tpu.memory_space<smem>>
    %c49 = arith.constant 49 : index
    %49 = memref.load %arg3[%c49] : memref<89xf32, #tpu.memory_space<smem>>
    %c50 = arith.constant 50 : index
    %50 = memref.load %arg3[%c50] : memref<89xf32, #tpu.memory_space<smem>>
    %c51 = arith.constant 51 : index
    %51 = memref.load %arg3[%c51] : memref<89xf32, #tpu.memory_space<smem>>
    %c52 = arith.constant 52 : index
    %52 = memref.load %arg3[%c52] : memref<89xf32, #tpu.memory_space<smem>>
    %c53 = arith.constant 53 : index
    %53 = memref.load %arg3[%c53] : memref<89xf32, #tpu.memory_space<smem>>
    %c54 = arith.constant 54 : index
    %54 = memref.load %arg3[%c54] : memref<89xf32, #tpu.memory_space<smem>>
    %c55 = arith.constant 55 : index
    %55 = memref.load %arg3[%c55] : memref<89xf32, #tpu.memory_space<smem>>
    %c56 = arith.constant 56 : index
    %56 = memref.load %arg3[%c56] : memref<89xf32, #tpu.memory_space<smem>>
    %c57 = arith.constant 57 : index
    %57 = memref.load %arg3[%c57] : memref<89xf32, #tpu.memory_space<smem>>
    %c58 = arith.constant 58 : index
    %58 = memref.load %arg3[%c58] : memref<89xf32, #tpu.memory_space<smem>>
    %c59 = arith.constant 59 : index
    %59 = memref.load %arg3[%c59] : memref<89xf32, #tpu.memory_space<smem>>
    %c60 = arith.constant 60 : index
    %60 = memref.load %arg3[%c60] : memref<89xf32, #tpu.memory_space<smem>>
    %c61 = arith.constant 61 : index
    %61 = memref.load %arg3[%c61] : memref<89xf32, #tpu.memory_space<smem>>
    %c62 = arith.constant 62 : index
    %62 = memref.load %arg3[%c62] : memref<89xf32, #tpu.memory_space<smem>>
    %c63 = arith.constant 63 : index
    %63 = memref.load %arg3[%c63] : memref<89xf32, #tpu.memory_space<smem>>
    %c64 = arith.constant 64 : index
    %64 = memref.load %arg3[%c64] : memref<89xf32, #tpu.memory_space<smem>>
    %c65 = arith.constant 65 : index
    %65 = memref.load %arg3[%c65] : memref<89xf32, #tpu.memory_space<smem>>
    %c66 = arith.constant 66 : index
    %66 = memref.load %arg3[%c66] : memref<89xf32, #tpu.memory_space<smem>>
    %c67 = arith.constant 67 : index
    %67 = memref.load %arg3[%c67] : memref<89xf32, #tpu.memory_space<smem>>
    %c68 = arith.constant 68 : index
    %68 = memref.load %arg3[%c68] : memref<89xf32, #tpu.memory_space<smem>>
    %c69 = arith.constant 69 : index
    %69 = memref.load %arg3[%c69] : memref<89xf32, #tpu.memory_space<smem>>
    %c70 = arith.constant 70 : index
    %70 = memref.load %arg3[%c70] : memref<89xf32, #tpu.memory_space<smem>>
    %c71 = arith.constant 71 : index
    %71 = memref.load %arg3[%c71] : memref<89xf32, #tpu.memory_space<smem>>
    %c72 = arith.constant 72 : index
    %72 = memref.load %arg3[%c72] : memref<89xf32, #tpu.memory_space<smem>>
    %c73 = arith.constant 73 : index
    %73 = memref.load %arg3[%c73] : memref<89xf32, #tpu.memory_space<smem>>
    %c74 = arith.constant 74 : index
    %74 = memref.load %arg3[%c74] : memref<89xf32, #tpu.memory_space<smem>>
    %c75 = arith.constant 75 : index
    %75 = memref.load %arg3[%c75] : memref<89xf32, #tpu.memory_space<smem>>
    %c76 = arith.constant 76 : index
    %76 = memref.load %arg3[%c76] : memref<89xf32, #tpu.memory_space<smem>>
    %c77 = arith.constant 77 : index
    %77 = memref.load %arg3[%c77] : memref<89xf32, #tpu.memory_space<smem>>
    %c78 = arith.constant 78 : index
    %78 = memref.load %arg3[%c78] : memref<89xf32, #tpu.memory_space<smem>>
    %c79 = arith.constant 79 : index
    %79 = memref.load %arg3[%c79] : memref<89xf32, #tpu.memory_space<smem>>
    %c80 = arith.constant 80 : index
    %80 = memref.load %arg3[%c80] : memref<89xf32, #tpu.memory_space<smem>>
    %c81 = arith.constant 81 : index
    %81 = memref.load %arg3[%c81] : memref<89xf32, #tpu.memory_space<smem>>
    %c82 = arith.constant 82 : index
    %82 = memref.load %arg3[%c82] : memref<89xf32, #tpu.memory_space<smem>>
    %c83 = arith.constant 83 : index
    %83 = memref.load %arg3[%c83] : memref<89xf32, #tpu.memory_space<smem>>
    %c84 = arith.constant 84 : index
    %84 = memref.load %arg3[%c84] : memref<89xf32, #tpu.memory_space<smem>>
    %c85 = arith.constant 85 : index
    %85 = memref.load %arg3[%c85] : memref<89xf32, #tpu.memory_space<smem>>
    %c86 = arith.constant 86 : index
    %86 = memref.load %arg3[%c86] : memref<89xf32, #tpu.memory_space<smem>>
    %c87 = arith.constant 87 : index
    %87 = memref.load %arg3[%c87] : memref<89xf32, #tpu.memory_space<smem>>
    %c88 = arith.constant 88 : index
    %88 = memref.load %arg3[%c88] : memref<89xf32, #tpu.memory_space<smem>>
    %c0_0 = arith.constant 0 : index
    %c0_1 = arith.constant 0 : index
    %c0_2 = arith.constant 0 : index
    %c0_3 = arith.constant 0 : index
    %89 = vector.load %arg2[%c0_0, %c0_1, %c0_2, %c0_3] : memref<4x1x2x128xbf16, #tpu.memory_space<vmem>>, vector<1x1x2x128xbf16>
    %90 = vector.shape_cast %89 : vector<1x1x2x128xbf16> to vector<2x128xbf16>
    %91 = arith.extf %90 : vector<2x128xbf16> to vector<2x128xf32>
    %c1_4 = arith.constant 1 : index
    %c0_5 = arith.constant 0 : index
    %c0_6 = arith.constant 0 : index
    %c0_7 = arith.constant 0 : index
    %92 = vector.load %arg2[%c1_4, %c0_5, %c0_6, %c0_7] : memref<4x1x2x128xbf16, #tpu.memory_space<vmem>>, vector<1x1x2x128xbf16>
    %93 = vector.shape_cast %92 : vector<1x1x2x128xbf16> to vector<2x128xbf16>
    %94 = arith.extf %93 : vector<2x128xbf16> to vector<2x128xf32>
    %c2_8 = arith.constant 2 : index
    %c0_9 = arith.constant 0 : index
    %c0_10 = arith.constant 0 : index
    %c0_11 = arith.constant 0 : index
    %95 = vector.load %arg2[%c2_8, %c0_9, %c0_10, %c0_11] : memref<4x1x2x128xbf16, #tpu.memory_space<vmem>>, vector<1x1x2x128xbf16>
    %96 = vector.shape_cast %95 : vector<1x1x2x128xbf16> to vector<2x128xbf16>
    %97 = arith.extf %96 : vector<2x128xbf16> to vector<2x128xf32>
    %c3_12 = arith.constant 3 : index
    %c0_13 = arith.constant 0 : index
    %c0_14 = arith.constant 0 : index
    %c0_15 = arith.constant 0 : index
    %98 = vector.load %arg2[%c3_12, %c0_13, %c0_14, %c0_15] : memref<4x1x2x128xbf16, #tpu.memory_space<vmem>>, vector<1x1x2x128xbf16>
    %99 = vector.shape_cast %98 : vector<1x1x2x128xbf16> to vector<2x128xbf16>
    %100 = arith.extf %99 : vector<2x128xbf16> to vector<2x128xf32>
    %101 = vector.broadcast %0 : f32 to vector<2x128xf32>
    %102 = arith.mulf %91, %101 : vector<2x128xf32>
    %103 = vector.broadcast %8 : f32 to vector<2x128xf32>
    %104 = arith.mulf %94, %103 : vector<2x128xf32>
    %105 = arith.addf %102, %104 : vector<2x128xf32>
    %106 = vector.broadcast %16 : f32 to vector<2x128xf32>
    %107 = arith.mulf %97, %106 : vector<2x128xf32>
    %108 = arith.addf %105, %107 : vector<2x128xf32>
    %109 = vector.broadcast %24 : f32 to vector<2x128xf32>
    %110 = arith.mulf %100, %109 : vector<2x128xf32>
    %111 = arith.addf %108, %110 : vector<2x128xf32>
    %112 = vector.broadcast %32 : f32 to vector<2x128xf32>
    %113 = arith.addf %111, %112 : vector<2x128xf32>
    %cst = arith.constant 0.000000e+00 : f32
    %114 = vector.broadcast %cst : f32 to vector<2x128xf32>
    %115 = arith.maximumf %113, %114 : vector<2x128xf32>
    %116 = vector.broadcast %1 : f32 to vector<2x128xf32>
    %117 = arith.mulf %91, %116 : vector<2x128xf32>
    %118 = vector.broadcast %9 : f32 to vector<2x128xf32>
    %119 = arith.mulf %94, %118 : vector<2x128xf32>
    %120 = arith.addf %117, %119 : vector<2x128xf32>
    %121 = vector.broadcast %17 : f32 to vector<2x128xf32>
    %122 = arith.mulf %97, %121 : vector<2x128xf32>
    %123 = arith.addf %120, %122 : vector<2x128xf32>
    %124 = vector.broadcast %25 : f32 to vector<2x128xf32>
    %125 = arith.mulf %100, %124 : vector<2x128xf32>
    %126 = arith.addf %123, %125 : vector<2x128xf32>
    %127 = vector.broadcast %33 : f32 to vector<2x128xf32>
    %128 = arith.addf %126, %127 : vector<2x128xf32>
    %cst_16 = arith.constant 0.000000e+00 : f32
    %129 = vector.broadcast %cst_16 : f32 to vector<2x128xf32>
    %130 = arith.maximumf %128, %129 : vector<2x128xf32>
    %131 = vector.broadcast %2 : f32 to vector<2x128xf32>
    %132 = arith.mulf %91, %131 : vector<2x128xf32>
    %133 = vector.broadcast %10 : f32 to vector<2x128xf32>
    %134 = arith.mulf %94, %133 : vector<2x128xf32>
    %135 = arith.addf %132, %134 : vector<2x128xf32>
    %136 = vector.broadcast %18 : f32 to vector<2x128xf32>
    %137 = arith.mulf %97, %136 : vector<2x128xf32>
    %138 = arith.addf %135, %137 : vector<2x128xf32>
    %139 = vector.broadcast %26 : f32 to vector<2x128xf32>
    %140 = arith.mulf %100, %139 : vector<2x128xf32>
    %141 = arith.addf %138, %140 : vector<2x128xf32>
    %142 = vector.broadcast %34 : f32 to vector<2x128xf32>
    %143 = arith.addf %141, %142 : vector<2x128xf32>
    %cst_17 = arith.constant 0.000000e+00 : f32
    %144 = vector.broadcast %cst_17 : f32 to vector<2x128xf32>
    %145 = arith.maximumf %143, %144 : vector<2x128xf32>
    %146 = vector.broadcast %3 : f32 to vector<2x128xf32>
    %147 = arith.mulf %91, %146 : vector<2x128xf32>
    %148 = vector.broadcast %11 : f32 to vector<2x128xf32>
    %149 = arith.mulf %94, %148 : vector<2x128xf32>
    %150 = arith.addf %147, %149 : vector<2x128xf32>
    %151 = vector.broadcast %19 : f32 to vector<2x128xf32>
    %152 = arith.mulf %97, %151 : vector<2x128xf32>
    %153 = arith.addf %150, %152 : vector<2x128xf32>
    %154 = vector.broadcast %27 : f32 to vector<2x128xf32>
    %155 = arith.mulf %100, %154 : vector<2x128xf32>
    %156 = arith.addf %153, %155 : vector<2x128xf32>
    %157 = vector.broadcast %35 : f32 to vector<2x128xf32>
    %158 = arith.addf %156, %157 : vector<2x128xf32>
    %cst_18 = arith.constant 0.000000e+00 : f32
    %159 = vector.broadcast %cst_18 : f32 to vector<2x128xf32>
    %160 = arith.maximumf %158, %159 : vector<2x128xf32>
    %161 = vector.broadcast %4 : f32 to vector<2x128xf32>
    %162 = arith.mulf %91, %161 : vector<2x128xf32>
    %163 = vector.broadcast %12 : f32 to vector<2x128xf32>
    %164 = arith.mulf %94, %163 : vector<2x128xf32>
    %165 = arith.addf %162, %164 : vector<2x128xf32>
    %166 = vector.broadcast %20 : f32 to vector<2x128xf32>
    %167 = arith.mulf %97, %166 : vector<2x128xf32>
    %168 = arith.addf %165, %167 : vector<2x128xf32>
    %169 = vector.broadcast %28 : f32 to vector<2x128xf32>
    %170 = arith.mulf %100, %169 : vector<2x128xf32>
    %171 = arith.addf %168, %170 : vector<2x128xf32>
    %172 = vector.broadcast %36 : f32 to vector<2x128xf32>
    %173 = arith.addf %171, %172 : vector<2x128xf32>
    %cst_19 = arith.constant 0.000000e+00 : f32
    %174 = vector.broadcast %cst_19 : f32 to vector<2x128xf32>
    %175 = arith.maximumf %173, %174 : vector<2x128xf32>
    %176 = vector.broadcast %5 : f32 to vector<2x128xf32>
    %177 = arith.mulf %91, %176 : vector<2x128xf32>
    %178 = vector.broadcast %13 : f32 to vector<2x128xf32>
    %179 = arith.mulf %94, %178 : vector<2x128xf32>
    %180 = arith.addf %177, %179 : vector<2x128xf32>
    %181 = vector.broadcast %21 : f32 to vector<2x128xf32>
    %182 = arith.mulf %97, %181 : vector<2x128xf32>
    %183 = arith.addf %180, %182 : vector<2x128xf32>
    %184 = vector.broadcast %29 : f32 to vector<2x128xf32>
    %185 = arith.mulf %100, %184 : vector<2x128xf32>
    %186 = arith.addf %183, %185 : vector<2x128xf32>
    %187 = vector.broadcast %37 : f32 to vector<2x128xf32>
    %188 = arith.addf %186, %187 : vector<2x128xf32>
    %cst_20 = arith.constant 0.000000e+00 : f32
    %189 = vector.broadcast %cst_20 : f32 to vector<2x128xf32>
    %190 = arith.maximumf %188, %189 : vector<2x128xf32>
    %191 = vector.broadcast %6 : f32 to vector<2x128xf32>
    %192 = arith.mulf %91, %191 : vector<2x128xf32>
    %193 = vector.broadcast %14 : f32 to vector<2x128xf32>
    %194 = arith.mulf %94, %193 : vector<2x128xf32>
    %195 = arith.addf %192, %194 : vector<2x128xf32>
    %196 = vector.broadcast %22 : f32 to vector<2x128xf32>
    %197 = arith.mulf %97, %196 : vector<2x128xf32>
    %198 = arith.addf %195, %197 : vector<2x128xf32>
    %199 = vector.broadcast %30 : f32 to vector<2x128xf32>
    %200 = arith.mulf %100, %199 : vector<2x128xf32>
    %201 = arith.addf %198, %200 : vector<2x128xf32>
    %202 = vector.broadcast %38 : f32 to vector<2x128xf32>
    %203 = arith.addf %201, %202 : vector<2x128xf32>
    %cst_21 = arith.constant 0.000000e+00 : f32
    %204 = vector.broadcast %cst_21 : f32 to vector<2x128xf32>
    %205 = arith.maximumf %203, %204 : vector<2x128xf32>
    %206 = vector.broadcast %7 : f32 to vector<2x128xf32>
    %207 = arith.mulf %91, %206 : vector<2x128xf32>
    %208 = vector.broadcast %15 : f32 to vector<2x128xf32>
    %209 = arith.mulf %94, %208 : vector<2x128xf32>
    %210 = arith.addf %207, %209 : vector<2x128xf32>
    %211 = vector.broadcast %23 : f32 to vector<2x128xf32>
    %212 = arith.mulf %97, %211 : vector<2x128xf32>
    %213 = arith.addf %210, %212 : vector<2x128xf32>
    %214 = vector.broadcast %31 : f32 to vector<2x128xf32>
    %215 = arith.mulf %100, %214 : vector<2x128xf32>
    %216 = arith.addf %213, %215 : vector<2x128xf32>
    %217 = vector.broadcast %39 : f32 to vector<2x128xf32>
    %218 = arith.addf %216, %217 : vector<2x128xf32>
    %cst_22 = arith.constant 0.000000e+00 : f32
    %219 = vector.broadcast %cst_22 : f32 to vector<2x128xf32>
    %220 = arith.maximumf %218, %219 : vector<2x128xf32>
    %221 = vector.broadcast %40 : f32 to vector<2x128xf32>
    %222 = arith.mulf %115, %221 : vector<2x128xf32>
    %223 = vector.broadcast %44 : f32 to vector<2x128xf32>
    %224 = arith.mulf %130, %223 : vector<2x128xf32>
    %225 = arith.addf %222, %224 : vector<2x128xf32>
    %226 = vector.broadcast %48 : f32 to vector<2x128xf32>
    %227 = arith.mulf %145, %226 : vector<2x128xf32>
    %228 = arith.addf %225, %227 : vector<2x128xf32>
    %229 = vector.broadcast %52 : f32 to vector<2x128xf32>
    %230 = arith.mulf %160, %229 : vector<2x128xf32>
    %231 = arith.addf %228, %230 : vector<2x128xf32>
    %232 = vector.broadcast %56 : f32 to vector<2x128xf32>
    %233 = arith.mulf %175, %232 : vector<2x128xf32>
    %234 = arith.addf %231, %233 : vector<2x128xf32>
    %235 = vector.broadcast %60 : f32 to vector<2x128xf32>
    %236 = arith.mulf %190, %235 : vector<2x128xf32>
    %237 = arith.addf %234, %236 : vector<2x128xf32>
    %238 = vector.broadcast %64 : f32 to vector<2x128xf32>
    %239 = arith.mulf %205, %238 : vector<2x128xf32>
    %240 = arith.addf %237, %239 : vector<2x128xf32>
    %241 = vector.broadcast %68 : f32 to vector<2x128xf32>
    %242 = arith.mulf %220, %241 : vector<2x128xf32>
    %243 = arith.addf %240, %242 : vector<2x128xf32>
    %244 = vector.broadcast %72 : f32 to vector<2x128xf32>
    %245 = arith.addf %243, %244 : vector<2x128xf32>
    %cst_23 = arith.constant 0.000000e+00 : f32
    %246 = vector.broadcast %cst_23 : f32 to vector<2x128xf32>
    %247 = arith.maximumf %245, %246 : vector<2x128xf32>
    %248 = vector.broadcast %41 : f32 to vector<2x128xf32>
    %249 = arith.mulf %115, %248 : vector<2x128xf32>
    %250 = vector.broadcast %45 : f32 to vector<2x128xf32>
    %251 = arith.mulf %130, %250 : vector<2x128xf32>
    %252 = arith.addf %249, %251 : vector<2x128xf32>
    %253 = vector.broadcast %49 : f32 to vector<2x128xf32>
    %254 = arith.mulf %145, %253 : vector<2x128xf32>
    %255 = arith.addf %252, %254 : vector<2x128xf32>
    %256 = vector.broadcast %53 : f32 to vector<2x128xf32>
    %257 = arith.mulf %160, %256 : vector<2x128xf32>
    %258 = arith.addf %255, %257 : vector<2x128xf32>
    %259 = vector.broadcast %57 : f32 to vector<2x128xf32>
    %260 = arith.mulf %175, %259 : vector<2x128xf32>
    %261 = arith.addf %258, %260 : vector<2x128xf32>
    %262 = vector.broadcast %61 : f32 to vector<2x128xf32>
    %263 = arith.mulf %190, %262 : vector<2x128xf32>
    %264 = arith.addf %261, %263 : vector<2x128xf32>
    %265 = vector.broadcast %65 : f32 to vector<2x128xf32>
    %266 = arith.mulf %205, %265 : vector<2x128xf32>
    %267 = arith.addf %264, %266 : vector<2x128xf32>
    %268 = vector.broadcast %69 : f32 to vector<2x128xf32>
    %269 = arith.mulf %220, %268 : vector<2x128xf32>
    %270 = arith.addf %267, %269 : vector<2x128xf32>
    %271 = vector.broadcast %73 : f32 to vector<2x128xf32>
    %272 = arith.addf %270, %271 : vector<2x128xf32>
    %cst_24 = arith.constant 0.000000e+00 : f32
    %273 = vector.broadcast %cst_24 : f32 to vector<2x128xf32>
    %274 = arith.maximumf %272, %273 : vector<2x128xf32>
    %275 = vector.broadcast %42 : f32 to vector<2x128xf32>
    %276 = arith.mulf %115, %275 : vector<2x128xf32>
    %277 = vector.broadcast %46 : f32 to vector<2x128xf32>
    %278 = arith.mulf %130, %277 : vector<2x128xf32>
    %279 = arith.addf %276, %278 : vector<2x128xf32>
    %280 = vector.broadcast %50 : f32 to vector<2x128xf32>
    %281 = arith.mulf %145, %280 : vector<2x128xf32>
    %282 = arith.addf %279, %281 : vector<2x128xf32>
    %283 = vector.broadcast %54 : f32 to vector<2x128xf32>
    %284 = arith.mulf %160, %283 : vector<2x128xf32>
    %285 = arith.addf %282, %284 : vector<2x128xf32>
    %286 = vector.broadcast %58 : f32 to vector<2x128xf32>
    %287 = arith.mulf %175, %286 : vector<2x128xf32>
    %288 = arith.addf %285, %287 : vector<2x128xf32>
    %289 = vector.broadcast %62 : f32 to vector<2x128xf32>
    %290 = arith.mulf %190, %289 : vector<2x128xf32>
    %291 = arith.addf %288, %290 : vector<2x128xf32>
    %292 = vector.broadcast %66 : f32 to vector<2x128xf32>
    %293 = arith.mulf %205, %292 : vector<2x128xf32>
    %294 = arith.addf %291, %293 : vector<2x128xf32>
    %295 = vector.broadcast %70 : f32 to vector<2x128xf32>
    %296 = arith.mulf %220, %295 : vector<2x128xf32>
    %297 = arith.addf %294, %296 : vector<2x128xf32>
    %298 = vector.broadcast %74 : f32 to vector<2x128xf32>
    %299 = arith.addf %297, %298 : vector<2x128xf32>
    %cst_25 = arith.constant 0.000000e+00 : f32
    %300 = vector.broadcast %cst_25 : f32 to vector<2x128xf32>
    %301 = arith.maximumf %299, %300 : vector<2x128xf32>
    %302 = vector.broadcast %43 : f32 to vector<2x128xf32>
    %303 = arith.mulf %115, %302 : vector<2x128xf32>
    %304 = vector.broadcast %47 : f32 to vector<2x128xf32>
    %305 = arith.mulf %130, %304 : vector<2x128xf32>
    %306 = arith.addf %303, %305 : vector<2x128xf32>
    %307 = vector.broadcast %51 : f32 to vector<2x128xf32>
    %308 = arith.mulf %145, %307 : vector<2x128xf32>
    %309 = arith.addf %306, %308 : vector<2x128xf32>
    %310 = vector.broadcast %55 : f32 to vector<2x128xf32>
    %311 = arith.mulf %160, %310 : vector<2x128xf32>
    %312 = arith.addf %309, %311 : vector<2x128xf32>
    %313 = vector.broadcast %59 : f32 to vector<2x128xf32>
    %314 = arith.mulf %175, %313 : vector<2x128xf32>
    %315 = arith.addf %312, %314 : vector<2x128xf32>
    %316 = vector.broadcast %63 : f32 to vector<2x128xf32>
    %317 = arith.mulf %190, %316 : vector<2x128xf32>
    %318 = arith.addf %315, %317 : vector<2x128xf32>
    %319 = vector.broadcast %67 : f32 to vector<2x128xf32>
    %320 = arith.mulf %205, %319 : vector<2x128xf32>
    %321 = arith.addf %318, %320 : vector<2x128xf32>
    %322 = vector.broadcast %71 : f32 to vector<2x128xf32>
    %323 = arith.mulf %220, %322 : vector<2x128xf32>
    %324 = arith.addf %321, %323 : vector<2x128xf32>
    %325 = vector.broadcast %75 : f32 to vector<2x128xf32>
    %326 = arith.addf %324, %325 : vector<2x128xf32>
    %cst_26 = arith.constant 0.000000e+00 : f32
    %327 = vector.broadcast %cst_26 : f32 to vector<2x128xf32>
    %328 = arith.maximumf %326, %327 : vector<2x128xf32>
    %329 = vector.broadcast %76 : f32 to vector<2x128xf32>
    %330 = arith.mulf %247, %329 : vector<2x128xf32>
    %331 = vector.broadcast %78 : f32 to vector<2x128xf32>
    %332 = arith.mulf %274, %331 : vector<2x128xf32>
    %333 = arith.addf %330, %332 : vector<2x128xf32>
    %334 = vector.broadcast %80 : f32 to vector<2x128xf32>
    %335 = arith.mulf %301, %334 : vector<2x128xf32>
    %336 = arith.addf %333, %335 : vector<2x128xf32>
    %337 = vector.broadcast %82 : f32 to vector<2x128xf32>
    %338 = arith.mulf %328, %337 : vector<2x128xf32>
    %339 = arith.addf %336, %338 : vector<2x128xf32>
    %340 = vector.broadcast %84 : f32 to vector<2x128xf32>
    %341 = arith.addf %339, %340 : vector<2x128xf32>
    %342 = vector.broadcast %77 : f32 to vector<2x128xf32>
    %343 = arith.mulf %247, %342 : vector<2x128xf32>
    %344 = vector.broadcast %79 : f32 to vector<2x128xf32>
    %345 = arith.mulf %274, %344 : vector<2x128xf32>
    %346 = arith.addf %343, %345 : vector<2x128xf32>
    %347 = vector.broadcast %81 : f32 to vector<2x128xf32>
    %348 = arith.mulf %301, %347 : vector<2x128xf32>
    %349 = arith.addf %346, %348 : vector<2x128xf32>
    %350 = vector.broadcast %83 : f32 to vector<2x128xf32>
    %351 = arith.mulf %328, %350 : vector<2x128xf32>
    %352 = arith.addf %349, %351 : vector<2x128xf32>
    %353 = vector.broadcast %85 : f32 to vector<2x128xf32>
    %354 = arith.addf %352, %353 : vector<2x128xf32>
    %cst_27 = arith.constant 0.000000e+00 : f32
    %355 = vector.broadcast %cst_27 : f32 to vector<2x128xf32>
    %356 = arith.subf %355, %341 : vector<2x128xf32>
    %357 = math.exp %356 : vector<2x128xf32>
    %cst_28 = arith.constant 1.000000e+00 : f32
    %358 = vector.broadcast %cst_28 : f32 to vector<2x128xf32>
    %359 = arith.addf %358, %357 : vector<2x128xf32>
    %360 = tpu.reciprocal %359 : vector<2x128xf32> -> vector<2x128xf32>
    %cst_29 = arith.constant 0.000000e+00 : f32
    %361 = vector.broadcast %cst_29 : f32 to vector<2x128xf32>
    %362 = arith.subf %361, %354 : vector<2x128xf32>
    %363 = math.exp %362 : vector<2x128xf32>
    %cst_30 = arith.constant 1.000000e+00 : f32
    %364 = vector.broadcast %cst_30 : f32 to vector<2x128xf32>
    %365 = arith.addf %364, %363 : vector<2x128xf32>
    %366 = tpu.reciprocal %365 : vector<2x128xf32> -> vector<2x128xf32>
    %cst_31 = arith.constant dense<0.000000e+00> : vector<2xf32>
    %367 = vector.multi_reduction <add>, %360, %cst_31 [1] : vector<2x128xf32> to vector<2xf32>
    %368 = vector.shape_cast %367 : vector<2xf32> to vector<2x1xf32>
    %cst_32 = arith.constant dense<0.000000e+00> : vector<2xf32>
    %369 = vector.multi_reduction <add>, %366, %cst_32 [1] : vector<2x128xf32> to vector<2xf32>
    %370 = vector.shape_cast %369 : vector<2xf32> to vector<2x1xf32>
    %cst_33 = arith.constant 0.000000e+00 : f32
    %371 = vector.broadcast %cst_33 : f32 to vector<1x1xf32>
    %372 = vector.broadcast %0 : f32 to vector<1x1xf32>
    %373 = arith.mulf %371, %372 : vector<1x1xf32>
    %374 = vector.broadcast %8 : f32 to vector<1x1xf32>
    %375 = arith.mulf %371, %374 : vector<1x1xf32>
    %376 = arith.addf %373, %375 : vector<1x1xf32>
    %377 = vector.broadcast %16 : f32 to vector<1x1xf32>
    %378 = arith.mulf %371, %377 : vector<1x1xf32>
    %379 = arith.addf %376, %378 : vector<1x1xf32>
    %380 = vector.broadcast %24 : f32 to vector<1x1xf32>
    %381 = arith.mulf %371, %380 : vector<1x1xf32>
    %382 = arith.addf %379, %381 : vector<1x1xf32>
    %383 = vector.broadcast %32 : f32 to vector<1x1xf32>
    %384 = arith.addf %382, %383 : vector<1x1xf32>
    %cst_34 = arith.constant 0.000000e+00 : f32
    %385 = vector.broadcast %cst_34 : f32 to vector<1x1xf32>
    %386 = arith.maximumf %384, %385 : vector<1x1xf32>
    %387 = vector.broadcast %1 : f32 to vector<1x1xf32>
    %388 = arith.mulf %371, %387 : vector<1x1xf32>
    %389 = vector.broadcast %9 : f32 to vector<1x1xf32>
    %390 = arith.mulf %371, %389 : vector<1x1xf32>
    %391 = arith.addf %388, %390 : vector<1x1xf32>
    %392 = vector.broadcast %17 : f32 to vector<1x1xf32>
    %393 = arith.mulf %371, %392 : vector<1x1xf32>
    %394 = arith.addf %391, %393 : vector<1x1xf32>
    %395 = vector.broadcast %25 : f32 to vector<1x1xf32>
    %396 = arith.mulf %371, %395 : vector<1x1xf32>
    %397 = arith.addf %394, %396 : vector<1x1xf32>
    %398 = vector.broadcast %33 : f32 to vector<1x1xf32>
    %399 = arith.addf %397, %398 : vector<1x1xf32>
    %cst_35 = arith.constant 0.000000e+00 : f32
    %400 = vector.broadcast %cst_35 : f32 to vector<1x1xf32>
    %401 = arith.maximumf %399, %400 : vector<1x1xf32>
    %402 = vector.broadcast %2 : f32 to vector<1x1xf32>
    %403 = arith.mulf %371, %402 : vector<1x1xf32>
    %404 = vector.broadcast %10 : f32 to vector<1x1xf32>
    %405 = arith.mulf %371, %404 : vector<1x1xf32>
    %406 = arith.addf %403, %405 : vector<1x1xf32>
    %407 = vector.broadcast %18 : f32 to vector<1x1xf32>
    %408 = arith.mulf %371, %407 : vector<1x1xf32>
    %409 = arith.addf %406, %408 : vector<1x1xf32>
    %410 = vector.broadcast %26 : f32 to vector<1x1xf32>
    %411 = arith.mulf %371, %410 : vector<1x1xf32>
    %412 = arith.addf %409, %411 : vector<1x1xf32>
    %413 = vector.broadcast %34 : f32 to vector<1x1xf32>
    %414 = arith.addf %412, %413 : vector<1x1xf32>
    %cst_36 = arith.constant 0.000000e+00 : f32
    %415 = vector.broadcast %cst_36 : f32 to vector<1x1xf32>
    %416 = arith.maximumf %414, %415 : vector<1x1xf32>
    %417 = vector.broadcast %3 : f32 to vector<1x1xf32>
    %418 = arith.mulf %371, %417 : vector<1x1xf32>
    %419 = vector.broadcast %11 : f32 to vector<1x1xf32>
    %420 = arith.mulf %371, %419 : vector<1x1xf32>
    %421 = arith.addf %418, %420 : vector<1x1xf32>
    %422 = vector.broadcast %19 : f32 to vector<1x1xf32>
    %423 = arith.mulf %371, %422 : vector<1x1xf32>
    %424 = arith.addf %421, %423 : vector<1x1xf32>
    %425 = vector.broadcast %27 : f32 to vector<1x1xf32>
    %426 = arith.mulf %371, %425 : vector<1x1xf32>
    %427 = arith.addf %424, %426 : vector<1x1xf32>
    %428 = vector.broadcast %35 : f32 to vector<1x1xf32>
    %429 = arith.addf %427, %428 : vector<1x1xf32>
    %cst_37 = arith.constant 0.000000e+00 : f32
    %430 = vector.broadcast %cst_37 : f32 to vector<1x1xf32>
    %431 = arith.maximumf %429, %430 : vector<1x1xf32>
    %432 = vector.broadcast %4 : f32 to vector<1x1xf32>
    %433 = arith.mulf %371, %432 : vector<1x1xf32>
    %434 = vector.broadcast %12 : f32 to vector<1x1xf32>
    %435 = arith.mulf %371, %434 : vector<1x1xf32>
    %436 = arith.addf %433, %435 : vector<1x1xf32>
    %437 = vector.broadcast %20 : f32 to vector<1x1xf32>
    %438 = arith.mulf %371, %437 : vector<1x1xf32>
    %439 = arith.addf %436, %438 : vector<1x1xf32>
    %440 = vector.broadcast %28 : f32 to vector<1x1xf32>
    %441 = arith.mulf %371, %440 : vector<1x1xf32>
    %442 = arith.addf %439, %441 : vector<1x1xf32>
    %443 = vector.broadcast %36 : f32 to vector<1x1xf32>
    %444 = arith.addf %442, %443 : vector<1x1xf32>
    %cst_38 = arith.constant 0.000000e+00 : f32
    %445 = vector.broadcast %cst_38 : f32 to vector<1x1xf32>
    %446 = arith.maximumf %444, %445 : vector<1x1xf32>
    %447 = vector.broadcast %5 : f32 to vector<1x1xf32>
    %448 = arith.mulf %371, %447 : vector<1x1xf32>
    %449 = vector.broadcast %13 : f32 to vector<1x1xf32>
    %450 = arith.mulf %371, %449 : vector<1x1xf32>
    %451 = arith.addf %448, %450 : vector<1x1xf32>
    %452 = vector.broadcast %21 : f32 to vector<1x1xf32>
    %453 = arith.mulf %371, %452 : vector<1x1xf32>
    %454 = arith.addf %451, %453 : vector<1x1xf32>
    %455 = vector.broadcast %29 : f32 to vector<1x1xf32>
    %456 = arith.mulf %371, %455 : vector<1x1xf32>
    %457 = arith.addf %454, %456 : vector<1x1xf32>
    %458 = vector.broadcast %37 : f32 to vector<1x1xf32>
    %459 = arith.addf %457, %458 : vector<1x1xf32>
    %cst_39 = arith.constant 0.000000e+00 : f32
    %460 = vector.broadcast %cst_39 : f32 to vector<1x1xf32>
    %461 = arith.maximumf %459, %460 : vector<1x1xf32>
    %462 = vector.broadcast %6 : f32 to vector<1x1xf32>
    %463 = arith.mulf %371, %462 : vector<1x1xf32>
    %464 = vector.broadcast %14 : f32 to vector<1x1xf32>
    %465 = arith.mulf %371, %464 : vector<1x1xf32>
    %466 = arith.addf %463, %465 : vector<1x1xf32>
    %467 = vector.broadcast %22 : f32 to vector<1x1xf32>
    %468 = arith.mulf %371, %467 : vector<1x1xf32>
    %469 = arith.addf %466, %468 : vector<1x1xf32>
    %470 = vector.broadcast %30 : f32 to vector<1x1xf32>
    %471 = arith.mulf %371, %470 : vector<1x1xf32>
    %472 = arith.addf %469, %471 : vector<1x1xf32>
    %473 = vector.broadcast %38 : f32 to vector<1x1xf32>
    %474 = arith.addf %472, %473 : vector<1x1xf32>
    %cst_40 = arith.constant 0.000000e+00 : f32
    %475 = vector.broadcast %cst_40 : f32 to vector<1x1xf32>
    %476 = arith.maximumf %474, %475 : vector<1x1xf32>
    %477 = vector.broadcast %7 : f32 to vector<1x1xf32>
    %478 = arith.mulf %371, %477 : vector<1x1xf32>
    %479 = vector.broadcast %15 : f32 to vector<1x1xf32>
    %480 = arith.mulf %371, %479 : vector<1x1xf32>
    %481 = arith.addf %478, %480 : vector<1x1xf32>
    %482 = vector.broadcast %23 : f32 to vector<1x1xf32>
    %483 = arith.mulf %371, %482 : vector<1x1xf32>
    %484 = arith.addf %481, %483 : vector<1x1xf32>
    %485 = vector.broadcast %31 : f32 to vector<1x1xf32>
    %486 = arith.mulf %371, %485 : vector<1x1xf32>
    %487 = arith.addf %484, %486 : vector<1x1xf32>
    %488 = vector.broadcast %39 : f32 to vector<1x1xf32>
    %489 = arith.addf %487, %488 : vector<1x1xf32>
    %cst_41 = arith.constant 0.000000e+00 : f32
    %490 = vector.broadcast %cst_41 : f32 to vector<1x1xf32>
    %491 = arith.maximumf %489, %490 : vector<1x1xf32>
    %492 = vector.broadcast %40 : f32 to vector<1x1xf32>
    %493 = arith.mulf %386, %492 : vector<1x1xf32>
    %494 = vector.broadcast %44 : f32 to vector<1x1xf32>
    %495 = arith.mulf %401, %494 : vector<1x1xf32>
    %496 = arith.addf %493, %495 : vector<1x1xf32>
    %497 = vector.broadcast %48 : f32 to vector<1x1xf32>
    %498 = arith.mulf %416, %497 : vector<1x1xf32>
    %499 = arith.addf %496, %498 : vector<1x1xf32>
    %500 = vector.broadcast %52 : f32 to vector<1x1xf32>
    %501 = arith.mulf %431, %500 : vector<1x1xf32>
    %502 = arith.addf %499, %501 : vector<1x1xf32>
    %503 = vector.broadcast %56 : f32 to vector<1x1xf32>
    %504 = arith.mulf %446, %503 : vector<1x1xf32>
    %505 = arith.addf %502, %504 : vector<1x1xf32>
    %506 = vector.broadcast %60 : f32 to vector<1x1xf32>
    %507 = arith.mulf %461, %506 : vector<1x1xf32>
    %508 = arith.addf %505, %507 : vector<1x1xf32>
    %509 = vector.broadcast %64 : f32 to vector<1x1xf32>
    %510 = arith.mulf %476, %509 : vector<1x1xf32>
    %511 = arith.addf %508, %510 : vector<1x1xf32>
    %512 = vector.broadcast %68 : f32 to vector<1x1xf32>
    %513 = arith.mulf %491, %512 : vector<1x1xf32>
    %514 = arith.addf %511, %513 : vector<1x1xf32>
    %515 = vector.broadcast %72 : f32 to vector<1x1xf32>
    %516 = arith.addf %514, %515 : vector<1x1xf32>
    %cst_42 = arith.constant 0.000000e+00 : f32
    %517 = vector.broadcast %cst_42 : f32 to vector<1x1xf32>
    %518 = arith.maximumf %516, %517 : vector<1x1xf32>
    %519 = vector.broadcast %41 : f32 to vector<1x1xf32>
    %520 = arith.mulf %386, %519 : vector<1x1xf32>
    %521 = vector.broadcast %45 : f32 to vector<1x1xf32>
    %522 = arith.mulf %401, %521 : vector<1x1xf32>
    %523 = arith.addf %520, %522 : vector<1x1xf32>
    %524 = vector.broadcast %49 : f32 to vector<1x1xf32>
    %525 = arith.mulf %416, %524 : vector<1x1xf32>
    %526 = arith.addf %523, %525 : vector<1x1xf32>
    %527 = vector.broadcast %53 : f32 to vector<1x1xf32>
    %528 = arith.mulf %431, %527 : vector<1x1xf32>
    %529 = arith.addf %526, %528 : vector<1x1xf32>
    %530 = vector.broadcast %57 : f32 to vector<1x1xf32>
    %531 = arith.mulf %446, %530 : vector<1x1xf32>
    %532 = arith.addf %529, %531 : vector<1x1xf32>
    %533 = vector.broadcast %61 : f32 to vector<1x1xf32>
    %534 = arith.mulf %461, %533 : vector<1x1xf32>
    %535 = arith.addf %532, %534 : vector<1x1xf32>
    %536 = vector.broadcast %65 : f32 to vector<1x1xf32>
    %537 = arith.mulf %476, %536 : vector<1x1xf32>
    %538 = arith.addf %535, %537 : vector<1x1xf32>
    %539 = vector.broadcast %69 : f32 to vector<1x1xf32>
    %540 = arith.mulf %491, %539 : vector<1x1xf32>
    %541 = arith.addf %538, %540 : vector<1x1xf32>
    %542 = vector.broadcast %73 : f32 to vector<1x1xf32>
    %543 = arith.addf %541, %542 : vector<1x1xf32>
    %cst_43 = arith.constant 0.000000e+00 : f32
    %544 = vector.broadcast %cst_43 : f32 to vector<1x1xf32>
    %545 = arith.maximumf %543, %544 : vector<1x1xf32>
    %546 = vector.broadcast %42 : f32 to vector<1x1xf32>
    %547 = arith.mulf %386, %546 : vector<1x1xf32>
    %548 = vector.broadcast %46 : f32 to vector<1x1xf32>
    %549 = arith.mulf %401, %548 : vector<1x1xf32>
    %550 = arith.addf %547, %549 : vector<1x1xf32>
    %551 = vector.broadcast %50 : f32 to vector<1x1xf32>
    %552 = arith.mulf %416, %551 : vector<1x1xf32>
    %553 = arith.addf %550, %552 : vector<1x1xf32>
    %554 = vector.broadcast %54 : f32 to vector<1x1xf32>
    %555 = arith.mulf %431, %554 : vector<1x1xf32>
    %556 = arith.addf %553, %555 : vector<1x1xf32>
    %557 = vector.broadcast %58 : f32 to vector<1x1xf32>
    %558 = arith.mulf %446, %557 : vector<1x1xf32>
    %559 = arith.addf %556, %558 : vector<1x1xf32>
    %560 = vector.broadcast %62 : f32 to vector<1x1xf32>
    %561 = arith.mulf %461, %560 : vector<1x1xf32>
    %562 = arith.addf %559, %561 : vector<1x1xf32>
    %563 = vector.broadcast %66 : f32 to vector<1x1xf32>
    %564 = arith.mulf %476, %563 : vector<1x1xf32>
    %565 = arith.addf %562, %564 : vector<1x1xf32>
    %566 = vector.broadcast %70 : f32 to vector<1x1xf32>
    %567 = arith.mulf %491, %566 : vector<1x1xf32>
    %568 = arith.addf %565, %567 : vector<1x1xf32>
    %569 = vector.broadcast %74 : f32 to vector<1x1xf32>
    %570 = arith.addf %568, %569 : vector<1x1xf32>
    %cst_44 = arith.constant 0.000000e+00 : f32
    %571 = vector.broadcast %cst_44 : f32 to vector<1x1xf32>
    %572 = arith.maximumf %570, %571 : vector<1x1xf32>
    %573 = vector.broadcast %43 : f32 to vector<1x1xf32>
    %574 = arith.mulf %386, %573 : vector<1x1xf32>
    %575 = vector.broadcast %47 : f32 to vector<1x1xf32>
    %576 = arith.mulf %401, %575 : vector<1x1xf32>
    %577 = arith.addf %574, %576 : vector<1x1xf32>
    %578 = vector.broadcast %51 : f32 to vector<1x1xf32>
    %579 = arith.mulf %416, %578 : vector<1x1xf32>
    %580 = arith.addf %577, %579 : vector<1x1xf32>
    %581 = vector.broadcast %55 : f32 to vector<1x1xf32>
    %582 = arith.mulf %431, %581 : vector<1x1xf32>
    %583 = arith.addf %580, %582 : vector<1x1xf32>
    %584 = vector.broadcast %59 : f32 to vector<1x1xf32>
    %585 = arith.mulf %446, %584 : vector<1x1xf32>
    %586 = arith.addf %583, %585 : vector<1x1xf32>
    %587 = vector.broadcast %63 : f32 to vector<1x1xf32>
    %588 = arith.mulf %461, %587 : vector<1x1xf32>
    %589 = arith.addf %586, %588 : vector<1x1xf32>
    %590 = vector.broadcast %67 : f32 to vector<1x1xf32>
    %591 = arith.mulf %476, %590 : vector<1x1xf32>
    %592 = arith.addf %589, %591 : vector<1x1xf32>
    %593 = vector.broadcast %71 : f32 to vector<1x1xf32>
    %594 = arith.mulf %491, %593 : vector<1x1xf32>
    %595 = arith.addf %592, %594 : vector<1x1xf32>
    %596 = vector.broadcast %75 : f32 to vector<1x1xf32>
    %597 = arith.addf %595, %596 : vector<1x1xf32>
    %cst_45 = arith.constant 0.000000e+00 : f32
    %598 = vector.broadcast %cst_45 : f32 to vector<1x1xf32>
    %599 = arith.maximumf %597, %598 : vector<1x1xf32>
    %600 = vector.broadcast %76 : f32 to vector<1x1xf32>
    %601 = arith.mulf %518, %600 : vector<1x1xf32>
    %602 = vector.broadcast %78 : f32 to vector<1x1xf32>
    %603 = arith.mulf %545, %602 : vector<1x1xf32>
    %604 = arith.addf %601, %603 : vector<1x1xf32>
    %605 = vector.broadcast %80 : f32 to vector<1x1xf32>
    %606 = arith.mulf %572, %605 : vector<1x1xf32>
    %607 = arith.addf %604, %606 : vector<1x1xf32>
    %608 = vector.broadcast %82 : f32 to vector<1x1xf32>
    %609 = arith.mulf %599, %608 : vector<1x1xf32>
    %610 = arith.addf %607, %609 : vector<1x1xf32>
    %611 = vector.broadcast %84 : f32 to vector<1x1xf32>
    %612 = arith.addf %610, %611 : vector<1x1xf32>
    %613 = vector.broadcast %77 : f32 to vector<1x1xf32>
    %614 = arith.mulf %518, %613 : vector<1x1xf32>
    %615 = vector.broadcast %79 : f32 to vector<1x1xf32>
    %616 = arith.mulf %545, %615 : vector<1x1xf32>
    %617 = arith.addf %614, %616 : vector<1x1xf32>
    %618 = vector.broadcast %81 : f32 to vector<1x1xf32>
    %619 = arith.mulf %572, %618 : vector<1x1xf32>
    %620 = arith.addf %617, %619 : vector<1x1xf32>
    %621 = vector.broadcast %83 : f32 to vector<1x1xf32>
    %622 = arith.mulf %599, %621 : vector<1x1xf32>
    %623 = arith.addf %620, %622 : vector<1x1xf32>
    %624 = vector.broadcast %85 : f32 to vector<1x1xf32>
    %625 = arith.addf %623, %624 : vector<1x1xf32>
    %cst_46 = arith.constant 0.000000e+00 : f32
    %626 = vector.broadcast %cst_46 : f32 to vector<1x1xf32>
    %627 = arith.subf %626, %612 : vector<1x1xf32>
    %628 = math.exp %627 : vector<1x1xf32>
    %cst_47 = arith.constant 1.000000e+00 : f32
    %629 = vector.broadcast %cst_47 : f32 to vector<1x1xf32>
    %630 = arith.addf %629, %628 : vector<1x1xf32>
    %631 = tpu.reciprocal %630 : vector<1x1xf32> -> vector<1x1xf32>
    %cst_48 = arith.constant 0.000000e+00 : f32
    %632 = vector.broadcast %cst_48 : f32 to vector<1x1xf32>
    %633 = arith.subf %632, %625 : vector<1x1xf32>
    %634 = math.exp %633 : vector<1x1xf32>
    %cst_49 = arith.constant 1.000000e+00 : f32
    %635 = vector.broadcast %cst_49 : f32 to vector<1x1xf32>
    %636 = arith.addf %635, %634 : vector<1x1xf32>
    %637 = tpu.reciprocal %636 : vector<1x1xf32> -> vector<1x1xf32>
    %638 = vector.extract_strided_slice %368 {offsets = [0, 0], sizes = [1, 1], strides = [1, 1]} : vector<2x1xf32> to vector<1x1xf32>
    %cst_50 = arith.constant dense<0.000000e+00> : vector<1xf32>
    %639 = vector.multi_reduction <add>, %638, %cst_50 [0] : vector<1x1xf32> to vector<1xf32>
    %640 = vector.shape_cast %639 : vector<1xf32> to vector<1x1xf32>
    %641 = vector.extract_strided_slice %370 {offsets = [0, 0], sizes = [1, 1], strides = [1, 1]} : vector<2x1xf32> to vector<1x1xf32>
    %cst_51 = arith.constant dense<0.000000e+00> : vector<1xf32>
    %642 = vector.multi_reduction <add>, %641, %cst_51 [0] : vector<1x1xf32> to vector<1xf32>
    %643 = vector.shape_cast %642 : vector<1xf32> to vector<1x1xf32>
    %cst_52 = arith.constant 0.000000e+00 : f32
    %644 = vector.broadcast %cst_52 : f32 to vector<1x1xf32>
    %645 = vector.broadcast %88 : f32 to vector<1x1xf32>
    %646 = arith.addf %644, %645 : vector<1x1xf32>
    %cst_53 = arith.constant 1.200000e+02 : f32
    %647 = vector.broadcast %cst_53 : f32 to vector<1x1xf32>
    %648 = arith.mulf %647, %631 : vector<1x1xf32>
    %649 = arith.subf %640, %648 : vector<1x1xf32>
    %cst_54 = arith.constant 1.250000e-01 : f32
    %650 = vector.broadcast %cst_54 : f32 to vector<1x1xf32>
    %651 = arith.mulf %649, %650 : vector<1x1xf32>
    %652 = vector.broadcast %86 : f32 to vector<1x1xf32>
    %653 = arith.mulf %651, %652 : vector<1x1xf32>
    %654 = arith.addf %646, %653 : vector<1x1xf32>
    %cst_55 = arith.constant 1.200000e+02 : f32
    %655 = vector.broadcast %cst_55 : f32 to vector<1x1xf32>
    %656 = arith.mulf %655, %637 : vector<1x1xf32>
    %657 = arith.subf %643, %656 : vector<1x1xf32>
    %cst_56 = arith.constant 1.250000e-01 : f32
    %658 = vector.broadcast %cst_56 : f32 to vector<1x1xf32>
    %659 = arith.mulf %657, %658 : vector<1x1xf32>
    %660 = vector.broadcast %87 : f32 to vector<1x1xf32>
    %661 = arith.mulf %659, %660 : vector<1x1xf32>
    %662 = arith.addf %654, %661 : vector<1x1xf32>
    %cst_57 = arith.constant 0.000000e+00 : f32
    %663 = vector.broadcast %cst_57 : f32 to vector<1x1xf32>
    %664 = arith.subf %663, %662 : vector<1x1xf32>
    %665 = math.exp %664 : vector<1x1xf32>
    %cst_58 = arith.constant 1.000000e+00 : f32
    %666 = vector.broadcast %cst_58 : f32 to vector<1x1xf32>
    %667 = arith.addf %666, %665 : vector<1x1xf32>
    %668 = tpu.reciprocal %667 : vector<1x1xf32> -> vector<1x1xf32>
    %669 = vector.shape_cast %668 : vector<1x1xf32> to vector<1x1xf32>
    %670 = vector.broadcast %669 : vector<1x1xf32> to vector<1x128xf32>
    %c0_59 = arith.constant 0 : index
    %c0_60 = arith.constant 0 : index
    %c0_61 = arith.constant 0 : index
    %671 = vector.load %arg4[%c0_59, %c0_60, %c0_61] : memref<1x2x128xf32, #tpu.memory_space<vmem>>, vector<1x1x128xf32>
    %672 = vector.shape_cast %671 : vector<1x1x128xf32> to vector<1x128xf32>
    %673 = vector.shape_cast %670 : vector<1x128xf32> to vector<1x1x128xf32>
    tpu.vector_store %arg4[%c0_59, %c0_60, %c0_61], %673 {strides = array<i32>} : memref<1x2x128xf32, #tpu.memory_space<vmem>>, vector<1x1x128xf32>,
    %674 = vector.extract_strided_slice %368 {offsets = [1, 0], sizes = [1, 1], strides = [1, 1]} : vector<2x1xf32> to vector<1x1xf32>
    %cst_62 = arith.constant dense<0.000000e+00> : vector<1xf32>
    %675 = vector.multi_reduction <add>, %674, %cst_62 [0] : vector<1x1xf32> to vector<1xf32>
    %676 = vector.shape_cast %675 : vector<1xf32> to vector<1x1xf32>
    %677 = vector.extract_strided_slice %370 {offsets = [1, 0], sizes = [1, 1], strides = [1, 1]} : vector<2x1xf32> to vector<1x1xf32>
    %cst_63 = arith.constant dense<0.000000e+00> : vector<1xf32>
    %678 = vector.multi_reduction <add>, %677, %cst_63 [0] : vector<1x1xf32> to vector<1xf32>
    %679 = vector.shape_cast %678 : vector<1xf32> to vector<1x1xf32>
    %cst_64 = arith.constant 0.000000e+00 : f32
    %680 = vector.broadcast %cst_64 : f32 to vector<1x1xf32>
    %681 = vector.broadcast %88 : f32 to vector<1x1xf32>
    %682 = arith.addf %680, %681 : vector<1x1xf32>
    %cst_65 = arith.constant 1.200000e+02 : f32
    %683 = vector.broadcast %cst_65 : f32 to vector<1x1xf32>
    %684 = arith.mulf %683, %631 : vector<1x1xf32>
    %685 = arith.subf %676, %684 : vector<1x1xf32>
    %cst_66 = arith.constant 1.250000e-01 : f32
    %686 = vector.broadcast %cst_66 : f32 to vector<1x1xf32>
    %687 = arith.mulf %685, %686 : vector<1x1xf32>
    %688 = vector.broadcast %86 : f32 to vector<1x1xf32>
    %689 = arith.mulf %687, %688 : vector<1x1xf32>
    %690 = arith.addf %682, %689 : vector<1x1xf32>
    %cst_67 = arith.constant 1.200000e+02 : f32
    %691 = vector.broadcast %cst_67 : f32 to vector<1x1xf32>
    %692 = arith.mulf %691, %637 : vector<1x1xf32>
    %693 = arith.subf %679, %692 : vector<1x1xf32>
    %cst_68 = arith.constant 1.250000e-01 : f32
    %694 = vector.broadcast %cst_68 : f32 to vector<1x1xf32>
    %695 = arith.mulf %693, %694 : vector<1x1xf32>
    %696 = vector.broadcast %87 : f32 to vector<1x1xf32>
    %697 = arith.mulf %695, %696 : vector<1x1xf32>
    %698 = arith.addf %690, %697 : vector<1x1xf32>
    %cst_69 = arith.constant 0.000000e+00 : f32
    %699 = vector.broadcast %cst_69 : f32 to vector<1x1xf32>
    %700 = arith.subf %699, %698 : vector<1x1xf32>
    %701 = math.exp %700 : vector<1x1xf32>
    %cst_70 = arith.constant 1.000000e+00 : f32
    %702 = vector.broadcast %cst_70 : f32 to vector<1x1xf32>
    %703 = arith.addf %702, %701 : vector<1x1xf32>
    %704 = tpu.reciprocal %703 : vector<1x1xf32> -> vector<1x1xf32>
    %705 = vector.shape_cast %704 : vector<1x1xf32> to vector<1x1xf32>
    %706 = vector.broadcast %705 : vector<1x1xf32> to vector<1x128xf32>
    %c0_71 = arith.constant 0 : index
    %c1_72 = arith.constant 1 : index
    %c0_73 = arith.constant 0 : index
    %707 = vector.load %arg4[%c0_71, %c1_72, %c0_73] : memref<1x2x128xf32, #tpu.memory_space<vmem>>, vector<1x1x128xf32>
    %708 = vector.shape_cast %707 : vector<1x1x128xf32> to vector<1x128xf32>
    %709 = vector.shape_cast %706 : vector<1x128xf32> to vector<1x1x128xf32>
    tpu.vector_store %arg4[%c0_71, %c1_72, %c0_73], %709 {strides = array<i32>} : memref<1x2x128xf32, #tpu.memory_space<vmem>>, vector<1x1x128xf32>,
    return
  }
  func.func @transform_0(%arg0: i32, %arg1: i32) -> (i32, i32, i32, i32) {
    %c0_i32 = arith.constant 0 : i32
    %c0_i32_0 = arith.constant 0 : i32
    %c0_i32_1 = arith.constant 0 : i32
    return %c0_i32, %arg0, %arg1, %c0_i32_0 : i32, i32, i32, i32
  }
  func.func @transform_1(%arg0: i32, %arg1: i32) -> i32 {
    %c0_i32 = arith.constant 0 : i32
    %c0_i32_0 = arith.constant 0 : i32
    return %c0_i32 : i32
  }
  func.func @transform_2(%arg0: i32, %arg1: i32) -> (i32, i32, i32) {
    %c0_i32 = arith.constant 0 : i32
    %c0_i32_0 = arith.constant 0 : i32
    %c0_i32_1 = arith.constant 0 : i32
    return %arg0, %c0_i32, %c0_i32_0 : i32, i32, i32
  }
}

</mosaic_0001>

<llo_original>
// kernel: pointset_forward.1
$region0: #{pointset_forward.1}
  #allocation0 [shape = 'u32[]', space=smem, size = 0x4, offset = 0x4, fixed_abs, tag = 'smem constant byte address 0x4 - core index']
  #allocation1 [shape = 'u32[144,128]{1,0:T(1,128)}', space=vmem, size = 0x12000, scoped, tag = 'internal scratch']
  %s0 = inlined_call_operand.vmem [shape: bf16[4,1,2,128], index: 0, kind: input, shape index: {}]
  %s1 = inlined_call_operand.vmem [shape: f32[89], index: 1, kind: input, shape index: {}]
  %s2 = inlined_call_operand.vmem [shape: f32[1,2,128], index: 2, kind: output, shape index: {}]
  %s3 = sld [smem:[#allocation0]]
  $region22: #{pointset_forward.1} parent=0
    _
  %s5 = ssub.s32 1, %s3
  %s6 = scalar_select 0, %s5, %s3
  $region1: #{pointset_forward.1} parent=0
    #allocation2 [shape = 'u8[512]{0}', space=smem, size = 0x200, scoped, tag = 'input window, operand 1, single buffered']
    #allocation3 [shape = 's32[1]{0}', space=sflag, size = 0x4, scoped, tag = 'scoped memory for pointset_forward.1']
    %7 = vsyncpa [#allocation3], 0
    // Predicated region
    $region2: #{pointset_forward.1} parent=1 // pred_check
      _
    $region3: #{pointset_forward.1} parent=1 // pred_check_branch
      %9 = sbr.rel (0) target = $region5
    $region4: #{pointset_forward.1} parent=1 // pred_region
      _
    $region5: #{pointset_forward.1} parent=1 // pred_fallthru
      _
    // Predicated region
    $region6: #{pointset_forward.1} parent=1 // pred_check
      _
    $region7: #{pointset_forward.1} parent=1 // pred_check_branch
      %11 = sbr.rel (0) target = $region9
    $region8: #{pointset_forward.1} parent=1 // pred_region
      %s13 = ssub.s32 16, 16
      %14 = vsyncadd [#allocation3], %s13
      %s16 = sshll.u32 %s1, 4
      %s17 = int_to_ptr.vmem [resolvable:$true] %s16
      %19 = dma.vmem_to_smem %s17, 16, [#allocation2], [#allocation3]
    $region9: #{pointset_forward.1} parent=1 // pred_fallthru
      _
    // Predicated region
    $region10: #{pointset_forward.1} parent=1 // pred_check
      _
    $region11: #{pointset_forward.1} parent=1 // pred_check_branch
      %21 = sbr.rel (0) target = $region13
    $region12: #{pointset_forward.1} parent=1 // pred_region
      %22 = dma.done [#allocation3], 16
    $region13: #{pointset_forward.1} parent=1 // pred_fallthru
      _
    %23 = sfence
    %s24 = sld [smem:[#allocation2]]
    %s25 = sld [smem:[#allocation2 + $0x1]]
    %s26 = sld [smem:[#allocation2 + $0x2]]
    %s27 = sld [smem:[#allocation2 + $0x3]]
    %s28 = sld [smem:[#allocation2 + $0x4]]
    %s29 = sld [smem:[#allocation2 + $0x5]]
    %s30 = sld [smem:[#allocation2 + $0x6]]
    %s31 = sld [smem:[#allocation2 + $0x7]]
    %s32 = sld [smem:[#allocation2 + $0x8]]
    %s33 = sld [smem:[#allocation2 + $0x9]]
    %s34 = sld [smem:[#allocation2 + $0xa]]
    %s35 = sld [smem:[#allocation2 + $0xb]]
    %s36 = sld [smem:[#allocation2 + $0xc]]
    %s37 = sld [smem:[#allocation2 + $0xd]]
    %s38 = sld [smem:[#allocation2 + $0xe]]
    %s39 = sld [smem:[#allocation2 + $0xf]]
    %s40 = sld [smem:[#allocation2 + $0x10]]
    %s41 = sld [smem:[#allocation2 + $0x11]]
    %s42 = sld [smem:[#allocation2 + $0x12]]
    %s43 = sld [smem:[#allocation2 + $0x13]]
    %s44 = sld [smem:[#allocation2 + $0x14]]
    %s45 = sld [smem:[#allocation2 + $0x15]]
    %s46 = sld [smem:[#allocation2 + $0x16]]
    %s47 = sld [smem:[#allocation2 + $0x17]]
    %s48 = sld [smem:[#allocation2 + $0x18]]
    %s49 = sld [smem:[#allocation2 + $0x19]]
    %s50 = sld [smem:[#allocation2 + $0x1a]]
    %s51 = sld [smem:[#allocation2 + $0x1b]]
    %s52 = sld [smem:[#allocation2 + $0x1c]]
    %s53 = sld [smem:[#allocation2 + $0x1d]]
    %s54 = sld [smem:[#allocation2 + $0x1e]]
    %s55 = sld [smem:[#allocation2 + $0x1f]]
    %s56 = sld [smem:[#allocation2 + $0x20]]
    %s57 = sld [smem:[#allocation2 + $0x21]]
    %s58 = sld [smem:[#allocation2 + $0x22]]
    %s59 = sld [smem:[#allocation2 + $0x23]]
    %s60 = sld [smem:[#allocation2 + $0x24]]
    %s61 = sld [smem:[#allocation2 + $0x25]]
    %s62 = sld [smem:[#allocation2 + $0x26]]
    %s63 = sld [smem:[#allocation2 + $0x27]]
    %s64 = sld [smem:[#allocation2 + $0x28]]
    %s65 = sld [smem:[#allocation2 + $0x29]]
    %s66 = sld [smem:[#allocation2 + $0x2a]]
    %s67 = sld [smem:[#allocation2 + $0x2b]]
    %s68 = sld [smem:[#allocation2 + $0x2c]]
    %s69 = sld [smem:[#allocation2 + $0x2d]]
    %s70 = sld [smem:[#allocation2 + $0x2e]]
    %s71 = sld [smem:[#allocation2 + $0x2f]]
    %s72 = sld [smem:[#allocation2 + $0x30]]
    %s73 = sld [smem:[#allocation2 + $0x31]]
    %s74 = sld [smem:[#allocation2 + $0x32]]
    %s75 = sld [smem:[#allocation2 + $0x33]]
    %s76 = sld [smem:[#allocation2 + $0x34]]
    %s77 = sld [smem:[#allocation2 + $0x35]]
    %s78 = sld [smem:[#allocation2 + $0x36]]
    %s79 = sld [smem:[#allocation2 + $0x37]]
    %s80 = sld [smem:[#allocation2 + $0x38]]
    %s81 = sld [smem:[#allocation2 + $0x39]]
    %s82 = sld [smem:[#allocation2 + $0x3a]]
    %s83 = sld [smem:[#allocation2 + $0x3b]]
    %s84 = sld [smem:[#allocation2 + $0x3c]]
    %s85 = sld [smem:[#allocation2 + $0x3d]]
    %s86 = sld [smem:[#allocation2 + $0x3e]]
    %s87 = sld [smem:[#allocation2 + $0x3f]]
    %s88 = sld [smem:[#allocation2 + $0x40]]
    %s89 = sld [smem:[#allocation2 + $0x41]]
    %s90 = sld [smem:[#allocation2 + $0x42]]
    %s91 = sld [smem:[#allocation2 + $0x43]]
    %s92 = sld [smem:[#allocation2 + $0x44]]
    %s93 = sld [smem:[#allocation2 + $0x45]]
    %s94 = sld [smem:[#allocation2 + $0x46]]
    %s95 = sld [smem:[#allocation2 + $0x47]]
    %s96 = sld [smem:[#allocation2 + $0x48]]
    %s97 = sld [smem:[#allocation2 + $0x49]]
    %s98 = sld [smem:[#allocation2 + $0x4a]]
    %s99 = sld [smem:[#allocation2 + $0x4b]]
    %s100 = sld [smem:[#allocation2 + $0x4c]]
    %s101 = sld [smem:[#allocation2 + $0x4d]]
    %s102 = sld [smem:[#allocation2 + $0x4e]]
    %s103 = sld [smem:[#allocation2 + $0x4f]]
    %s104 = sld [smem:[#allocation2 + $0x50]]
    %s105 = sld [smem:[#allocation2 + $0x51]]
    %s106 = sld [smem:[#allocation2 + $0x52]]
    %s107 = sld [smem:[#allocation2 + $0x53]]
    %s108 = sld [smem:[#allocation2 + $0x54]]
    %s109 = sld [smem:[#allocation2 + $0x55]]
    %s110 = sld [smem:[#allocation2 + $0x56]]
    %s111 = sld [smem:[#allocation2 + $0x57]]
    %s112 = sld [smem:[#allocation2 + $0x58]]
    %v113 = vld [vmem:[%s0] sm:$0x1]
    %v114 = vunpack.c.l.bf16 %v113
    %s115 = scalar_lea.vmem %s0, 1
    %v116 = vld [vmem:[%s115] sm:$0x1]
    %v117 = vunpack.c.l.bf16 %v116
    %s118 = scalar_lea.vmem %s0, 2
    %v119 = vld [vmem:[%s118] sm:$0x1]
    %v120 = vunpack.c.l.bf16 %v119
    %s121 = scalar_lea.vmem %s0, 3
    %v122 = vld [vmem:[%s121] sm:$0x1]
    %v123 = vunpack.c.l.bf16 %v122
    %v124 = vstv %s24
    %v125 = vmul.f32 %v114, %v124
    %v126 = vstv %s32
    %v127 = vmul.f32 %v117, %v126
    %v128 = vadd.f32 %v125, %v127
    %v129 = vstv %s40
    %v130 = vmul.f32 %v120, %v129
    %v131 = vadd.f32 %v128, %v130
    %v132 = vstv %s48
    %v133 = vmul.f32 %v123, %v132
    %v134 = vadd.f32 %v131, %v133
    %v135 = vstv %s56
    %v136 = vadd.f32 %v134, %v135
    %v137 = vmax.f32 %v136, 0.0
    %v138 = vstv %s25
    %v139 = vmul.f32 %v114, %v138
    %v140 = vstv %s33
    %v141 = vmul.f32 %v117, %v140
    %v142 = vadd.f32 %v139, %v141
    %v143 = vstv %s41
    %v144 = vmul.f32 %v120, %v143
    %v145 = vadd.f32 %v142, %v144
    %v146 = vstv %s49
    %v147 = vmul.f32 %v123, %v146
    %v148 = vadd.f32 %v145, %v147
    %v149 = vstv %s57
    %v150 = vadd.f32 %v148, %v149
    %v151 = vmax.f32 %v150, 0.0
    %v152 = vstv %s26
    %v153 = vmul.f32 %v114, %v152
    %v154 = vstv %s34
    %v155 = vmul.f32 %v117, %v154
    %v156 = vadd.f32 %v153, %v155
    %v157 = vstv %s42
    %v158 = vmul.f32 %v120, %v157
    %v159 = vadd.f32 %v156, %v158
    %v160 = vstv %s50
    %v161 = vmul.f32 %v123, %v160
    %v162 = vadd.f32 %v159, %v161
    %v163 = vstv %s58
    %v164 = vadd.f32 %v162, %v163
    %v165 = vmax.f32 %v164, 0.0
    %v166 = vstv %s27
    %v167 = vmul.f32 %v114, %v166
    %v168 = vstv %s35
    %v169 = vmul.f32 %v117, %v168
    %v170 = vadd.f32 %v167, %v169
    %v171 = vstv %s43
    %v172 = vmul.f32 %v120, %v171
    %v173 = vadd.f32 %v170, %v172
    %v174 = vstv %s51
    %v175 = vmul.f32 %v123, %v174
    %v176 = vadd.f32 %v173, %v175
    %v177 = vstv %s59
    %v178 = vadd.f32 %v176, %v177
    %v179 = vmax.f32 %v178, 0.0
    %v180 = vstv %s28
    %v181 = vmul.f32 %v114, %v180
    %v182 = vstv %s36
    %v183 = vmul.f32 %v117, %v182
    %v184 = vadd.f32 %v181, %v183
    %v185 = vstv %s44
    %v186 = vmul.f32 %v120, %v185
    %v187 = vadd.f32 %v184, %v186
    %v188 = vstv %s52
    %v189 = vmul.f32 %v123, %v188
    %v190 = vadd.f32 %v187, %v189
    %v191 = vstv %s60
    %v192 = vadd.f32 %v190, %v191
    %v193 = vmax.f32 %v192, 0.0
    %v194 = vstv %s29
    %v195 = vmul.f32 %v114, %v194
    %v196 = vstv %s37
    %v197 = vmul.f32 %v117, %v196
    %v198 = vadd.f32 %v195, %v197
    %v199 = vstv %s45
    %v200 = vmul.f32 %v120, %v199
    %v201 = vadd.f32 %v198, %v200
    %v202 = vstv %s53
    %v203 = vmul.f32 %v123, %v202
    %v204 = vadd.f32 %v201, %v203
    %v205 = vstv %s61
    %v206 = vadd.f32 %v204, %v205
    %v207 = vmax.f32 %v206, 0.0
    %v208 = vstv %s30
    %v209 = vmul.f32 %v114, %v208
    %v210 = vstv %s38
    %v211 = vmul.f32 %v117, %v210
    %v212 = vadd.f32 %v209, %v211
    %v213 = vstv %s46
    %v214 = vmul.f32 %v120, %v213
    %v215 = vadd.f32 %v212, %v214
    %v216 = vstv %s54
    %v217 = vmul.f32 %v123, %v216
    %v218 = vadd.f32 %v215, %v217
    %v219 = vstv %s62
    %v220 = vadd.f32 %v218, %v219
    %v221 = vmax.f32 %v220, 0.0
    %v222 = vstv %s31
    %v223 = vmul.f32 %v114, %v222
    %v224 = vstv %s39
    %v225 = vmul.f32 %v117, %v224
    %v226 = vadd.f32 %v223, %v225
    %v227 = vstv %s47
    %v228 = vmul.f32 %v120, %v227
    %v229 = vadd.f32 %v226, %v228
    %v230 = vstv %s55
    %v231 = vmul.f32 %v123, %v230
    %v232 = vadd.f32 %v229, %v231
    %v233 = vstv %s63
    %v234 = vadd.f32 %v232, %v233
    %v235 = vmax.f32 %v234, 0.0
    %v236 = vstv %s64
    %v237 = vmul.f32 %v137, %v236
    %v238 = vstv %s68
    %v239 = vmul.f32 %v151, %v238
    %v240 = vadd.f32 %v237, %v239
    %v241 = vstv %s72
    %v242 = vmul.f32 %v165, %v241
    %v243 = vadd.f32 %v240, %v242
    %v244 = vstv %s76
    %v245 = vmul.f32 %v179, %v244
    %v246 = vadd.f32 %v243, %v245
    %v247 = vstv %s80
    %v248 = vmul.f32 %v193, %v247
    %v249 = vadd.f32 %v246, %v248
    %v250 = vstv %s84
    %v251 = vmul.f32 %v207, %v250
    %v252 = vadd.f32 %v249, %v251
    %v253 = vstv %s88
    %v254 = vmul.f32 %v221, %v253
    %v255 = vadd.f32 %v252, %v254
    %v256 = vstv %s92
    %v257 = vmul.f32 %v235, %v256
    %v258 = vadd.f32 %v255, %v257
    %v259 = vstv %s96
    %v260 = vadd.f32 %v258, %v259
    %v261 = vmax.f32 %v260, 0.0
    %v262 = vstv %s65
    %v263 = vmul.f32 %v137, %v262
    %v264 = vstv %s69
    %v265 = vmul.f32 %v151, %v264
    %v266 = vadd.f32 %v263, %v265
    %v267 = vstv %s73
    %v268 = vmul.f32 %v165, %v267
    %v269 = vadd.f32 %v266, %v268
    %v270 = vstv %s77
    %v271 = vmul.f32 %v179, %v270
    %v272 = vadd.f32 %v269, %v271
    %v273 = vstv %s81
    %v274 = vmul.f32 %v193, %v273
    %v275 = vadd.f32 %v272, %v274
    %v276 = vstv %s85
    %v277 = vmul.f32 %v207, %v276
    %v278 = vadd.f32 %v275, %v277
    %v279 = vstv %s89
    %v280 = vmul.f32 %v221, %v279
    %v281 = vadd.f32 %v278, %v280
    %v282 = vstv %s93
    %v283 = vmul.f32 %v235, %v282
    %v284 = vadd.f32 %v281, %v283
    %v285 = vstv %s97
    %v286 = vadd.f32 %v284, %v285
    %v287 = vmax.f32 %v286, 0.0
    %v288 = vstv %s66
    %v289 = vmul.f32 %v137, %v288
    %v290 = vstv %s70
    %v291 = vmul.f32 %v151, %v290
    %v292 = vadd.f32 %v289, %v291
    %v293 = vstv %s74
    %v294 = vmul.f32 %v165, %v293
    %v295 = vadd.f32 %v292, %v294
    %v296 = vstv %s78
    %v297 = vmul.f32 %v179, %v296
    %v298 = vadd.f32 %v295, %v297
    %v299 = vstv %s82
    %v300 = vmul.f32 %v193, %v299
    %v301 = vadd.f32 %v298, %v300
    %v302 = vstv %s86
    %v303 = vmul.f32 %v207, %v302
    %v304 = vadd.f32 %v301, %v303
    %v305 = vstv %s90
    %v306 = vmul.f32 %v221, %v305
    %v307 = vadd.f32 %v304, %v306
    %v308 = vstv %s94
    %v309 = vmul.f32 %v235, %v308
    %v310 = vadd.f32 %v307, %v309
    %v311 = vstv %s98
    %v312 = vadd.f32 %v310, %v311
    %v313 = vmax.f32 %v312, 0.0
    %v314 = vstv %s67
    %v315 = vmul.f32 %v137, %v314
    %v316 = vstv %s71
    %v317 = vmul.f32 %v151, %v316
    %v318 = vadd.f32 %v315, %v317
    %v319 = vstv %s75
    %v320 = vmul.f32 %v165, %v319
    %v321 = vadd.f32 %v318, %v320
    %v322 = vstv %s79
    %v323 = vmul.f32 %v179, %v322
    %v324 = vadd.f32 %v321, %v323
    %v325 = vstv %s83
    %v326 = vmul.f32 %v193, %v325
    %v327 = vadd.f32 %v324, %v326
    %v328 = vstv %s87
    %v329 = vmul.f32 %v207, %v328
    %v330 = vadd.f32 %v327, %v329
    %v331 = vstv %s91
    %v332 = vmul.f32 %v221, %v331
    %v333 = vadd.f32 %v330, %v332
    %v334 = vstv %s95
    %v335 = vmul.f32 %v235, %v334
    %v336 = vadd.f32 %v333, %v335
    %v337 = vstv %s99
    %v338 = vadd.f32 %v336, %v337
    %v339 = vmax.f32 %v338, 0.0
    %v340 = vstv %s100
    %v341 = vmul.f32 %v261, %v340
    %v342 = vstv %s102
    %v343 = vmul.f32 %v287, %v342
    %v344 = vadd.f32 %v341, %v343
    %v345 = vstv %s104
    %v346 = vmul.f32 %v313, %v345
    %v347 = vadd.f32 %v344, %v346
    %v348 = vstv %s106
    %v349 = vmul.f32 %v339, %v348
    %v350 = vadd.f32 %v347, %v349
    %v351 = vstv %s108
    %v352 = vadd.f32 %v350, %v351
    %v353 = vstv %s101
    %v354 = vmul.f32 %v261, %v353
    %v355 = vstv %s103
    %v356 = vmul.f32 %v287, %v355
    %v357 = vadd.f32 %v354, %v356
    %v358 = vstv %s105
    %v359 = vmul.f32 %v313, %v358
    %v360 = vadd.f32 %v357, %v359
    %v361 = vstv %s107
    %v362 = vmul.f32 %v339, %v361
    %v363 = vadd.f32 %v360, %v362
    %v364 = vstv %s109
    %v365 = vadd.f32 %v363, %v364
    %v366 = vsub.f32 0.0, %v352
    %v367 = vmul.f32 %v366, 1.442695
    %v368 = vpow.pop %v367
    %v369 = vadd.f32 %v368, 1.0
    %v370 = vrcp.pop %v369
    %v371 = vsub.f32 0.0, %v365
    %v372 = vmul.f32 %v371, 1.442695
    %v373 = vpow.pop %v372
    %v374 = vadd.f32 %v373, 1.0
    %v375 = vrcp.pop %v374
    %vm376 = vcmask 1041408
    %v377 = vsel %vm376, %v370, 0.0
    %378 = vadd.xlane.f32.xlu0 %v377
    %v379 = vpop.xlane.xlu0 %378
    %v380 = vsel %vm376, %v375, 0.0
    %381 = vadd.xlane.f32.xlu0 %v380
    %v382 = vpop.xlane.xlu0 %381
    %v383 = vmul.f32 %v124, 0.0
    %v384 = vmul.f32 %v126, 0.0
    %v385 = vadd.f32 %v383, %v384
    %v386 = vmul.f32 %v129, 0.0
    %v387 = vadd.f32 %v385, %v386
    %v388 = vmul.f32 %v132, 0.0
    %v389 = vadd.f32 %v387, %v388
    %v390 = vadd.f32 %v389, %v135
    %v391 = vmax.f32 %v390, 0.0
    %v392 = vmul.f32 %v138, 0.0
    %v393 = vmul.f32 %v140, 0.0
    %v394 = vadd.f32 %v392, %v393
    %v395 = vmul.f32 %v143, 0.0
    %v396 = vadd.f32 %v394, %v395
    %v397 = vmul.f32 %v146, 0.0
    %v398 = vadd.f32 %v396, %v397
    %v399 = vadd.f32 %v398, %v149
    %v400 = vmax.f32 %v399, 0.0
    %v401 = vmul.f32 %v152, 0.0
    %v402 = vmul.f32 %v154, 0.0
    %v403 = vadd.f32 %v401, %v402
    %v404 = vmul.f32 %v157, 0.0
    %v405 = vadd.f32 %v403, %v404
    %v406 = vmul.f32 %v160, 0.0
    %v407 = vadd.f32 %v405, %v406
    %v408 = vadd.f32 %v407, %v163
    %v409 = vmax.f32 %v408, 0.0
    %v410 = vmul.f32 %v166, 0.0
    %v411 = vmul.f32 %v168, 0.0
    %v412 = vadd.f32 %v410, %v411
    %v413 = vmul.f32 %v171, 0.0
    %v414 = vadd.f32 %v412, %v413
    %v415 = vmul.f32 %v174, 0.0
    %v416 = vadd.f32 %v414, %v415
    %v417 = vadd.f32 %v416, %v177
    %v418 = vmax.f32 %v417, 0.0
    %v419 = vmul.f32 %v180, 0.0
    %v420 = vmul.f32 %v182, 0.0
    %v421 = vadd.f32 %v419, %v420
    %v422 = vmul.f32 %v185, 0.0
    %v423 = vadd.f32 %v421, %v422
    %v424 = vmul.f32 %v188, 0.0
    %v425 = vadd.f32 %v423, %v424
    %v426 = vadd.f32 %v425, %v191
    %v427 = vmax.f32 %v426, 0.0
    %v428 = vmul.f32 %v194, 0.0
    %v429 = vmul.f32 %v196, 0.0
    %v430 = vadd.f32 %v428, %v429
    %v431 = vmul.f32 %v199, 0.0
    %v432 = vadd.f32 %v430, %v431
    %v433 = vmul.f32 %v202, 0.0
    %v434 = vadd.f32 %v432, %v433
    %v435 = vadd.f32 %v434, %v205
    %v436 = vmax.f32 %v435, 0.0
    %v437 = vmul.f32 %v208, 0.0
    %v438 = vmul.f32 %v210, 0.0
    %v439 = vadd.f32 %v437, %v438
    %v440 = vmul.f32 %v213, 0.0
    %v441 = vadd.f32 %v439, %v440
    %v442 = vmul.f32 %v216, 0.0
    %v443 = vadd.f32 %v441, %v442
    %v444 = vadd.f32 %v443, %v219
    %v445 = vmax.f32 %v444, 0.0
    %v446 = vmul.f32 %v222, 0.0
    %v447 = vmul.f32 %v224, 0.0
    %v448 = vadd.f32 %v446, %v447
    %v449 = vmul.f32 %v227, 0.0
    %v450 = vadd.f32 %v448, %v449
    %v451 = vmul.f32 %v230, 0.0
    %v452 = vadd.f32 %v450, %v451
    %v453 = vadd.f32 %v452, %v233
    %v454 = vmax.f32 %v453, 0.0
    %v455 = vmul.f32 %v391, %v236
    %v456 = vmul.f32 %v400, %v238
    %v457 = vadd.f32 %v455, %v456
    %v458 = vmul.f32 %v409, %v241
    %v459 = vadd.f32 %v457, %v458
    %v460 = vmul.f32 %v418, %v244
    %v461 = vadd.f32 %v459, %v460
    %v462 = vmul.f32 %v427, %v247
    %v463 = vadd.f32 %v461, %v462
    %v464 = vmul.f32 %v436, %v250
    %v465 = vadd.f32 %v463, %v464
    %v466 = vmul.f32 %v445, %v253
    %v467 = vadd.f32 %v465, %v466
    %v468 = vmul.f32 %v454, %v256
    %v469 = vadd.f32 %v467, %v468
    %v470 = vadd.f32 %v469, %v259
    %v471 = vmax.f32 %v470, 0.0
    %v472 = vmul.f32 %v391, %v262
    %v473 = vmul.f32 %v400, %v264
    %v474 = vadd.f32 %v472, %v473
    %v475 = vmul.f32 %v409, %v267
    %v476 = vadd.f32 %v474, %v475
    %v477 = vmul.f32 %v418, %v270
    %v478 = vadd.f32 %v476, %v477
    %v479 = vmul.f32 %v427, %v273
    %v480 = vadd.f32 %v478, %v479
    %v481 = vmul.f32 %v436, %v276
    %v482 = vadd.f32 %v480, %v481
    %v483 = vmul.f32 %v445, %v279
    %v484 = vadd.f32 %v482, %v483
    %v485 = vmul.f32 %v454, %v282
    %v486 = vadd.f32 %v484, %v485
    %v487 = vadd.f32 %v486, %v285
    %v488 = vmax.f32 %v487, 0.0
    %v489 = vmul.f32 %v391, %v288
    %v490 = vmul.f32 %v400, %v290
    %v491 = vadd.f32 %v489, %v490
    %v492 = vmul.f32 %v409, %v293
    %v493 = vadd.f32 %v491, %v492
    %v494 = vmul.f32 %v418, %v296
    %v495 = vadd.f32 %v493, %v494
    %v496 = vmul.f32 %v427, %v299
    %v497 = vadd.f32 %v495, %v496
    %v498 = vmul.f32 %v436, %v302
    %v499 = vadd.f32 %v497, %v498
    %v500 = vmul.f32 %v445, %v305
    %v501 = vadd.f32 %v499, %v500
    %v502 = vmul.f32 %v454, %v308
    %v503 = vadd.f32 %v501, %v502
    %v504 = vadd.f32 %v503, %v311
    %v505 = vmax.f32 %v504, 0.0
    %v506 = vmul.f32 %v391, %v314
    %v507 = vmul.f32 %v400, %v316
    %v508 = vadd.f32 %v506, %v507
    %v509 = vmul.f32 %v409, %v319
    %v510 = vadd.f32 %v508, %v509
    %v511 = vmul.f32 %v418, %v322
    %v512 = vadd.f32 %v510, %v511
    %v513 = vmul.f32 %v427, %v325
    %v514 = vadd.f32 %v512, %v513
    %v515 = vmul.f32 %v436, %v328
    %v516 = vadd.f32 %v514, %v515
    %v517 = vmul.f32 %v445, %v331
    %v518 = vadd.f32 %v516, %v517
    %v519 = vmul.f32 %v454, %v334
    %v520 = vadd.f32 %v518, %v519
    %v521 = vadd.f32 %v520, %v337
    %v522 = vmax.f32 %v521, 0.0
    %v523 = vmul.f32 %v471, %v340
    %v524 = vmul.f32 %v488, %v342
    %v525 = vadd.f32 %v523, %v524
    %v526 = vmul.f32 %v505, %v345
    %v527 = vadd.f32 %v525, %v526
    %v528 = vmul.f32 %v522, %v348
    %v529 = vadd.f32 %v527, %v528
    %v530 = vadd.f32 %v529, %v351
    %v531 = vmul.f32 %v471, %v353
    %v532 = vmul.f32 %v488, %v355
    %v533 = vadd.f32 %v531, %v532
    %v534 = vmul.f32 %v505, %v358
    %v535 = vadd.f32 %v533, %v534
    %v536 = vmul.f32 %v522, %v361
    %v537 = vadd.f32 %v535, %v536
    %v538 = vadd.f32 %v537, %v364
    %v539 = vsub.f32 0.0, %v530
    %v540 = vmul.f32 %v539, 1.442695
    %v541 = vpow.pop %v540
    %v542 = vadd.f32 %v541, 1.0
    %v543 = vrcp.pop %v542
    %v544 = vsub.f32 0.0, %v538
    %v545 = vmul.f32 %v544, 1.442695
    %v546 = vpow.pop %v545
    %v547 = vadd.f32 %v546, 1.0
    %v548 = vrcp.pop %v547
    %v549 = vadd.f32 %v379, 0.0
    %v550 = vadd.f32 %v382, 0.0
    %v551 = vstv %s112
    %v552 = vadd.f32 %v551, 0.0
    %v553 = vmul.f32 %v543, 120.0
    %v554 = vsub.f32 %v549, %v553
    %v555 = vmul.f32 %v554, 0.125
    %v556 = vstv %s110
    %v557 = vmul.f32 %v555, %v556
    %v558 = vadd.f32 %v552, %v557
    %v559 = vmul.f32 %v548, 120.0
    %v560 = vsub.f32 %v550, %v559
    %v561 = vmul.f32 %v560, 0.125
    %v562 = vstv %s111
    %v563 = vmul.f32 %v561, %v562
    %v564 = vadd.f32 %v558, %v563
    %v565 = vsub.f32 0.0, %v564
    %v566 = vmul.f32 %v565, 1.442695
    %v567 = vpow.pop %v566
    %v568 = vadd.f32 %v567, 1.0
    %v569 = vrcp.pop %v568
    %570 = vst [vmem:[%s2] sm:$0x1] %v569
    %571 = vst [vmem:[%s2] sm:$0x2] %v569
    // Predicated region
    $region14: #{pointset_forward.1} parent=1 // pred_check
      _
    $region15: #{pointset_forward.1} parent=1 // pred_check_branch
      %573 = sbr.rel (0) target = $region17
    $region16: #{pointset_forward.1} parent=1 // pred_region
      _
    $region17: #{pointset_forward.1} parent=1 // pred_fallthru
      _
    // Predicated region
    $region18: #{pointset_forward.1} parent=1 // pred_check
      _
    $region19: #{pointset_forward.1} parent=1 // pred_check_branch
      %575 = sbr.rel (0) target = $region21
    $region20: #{pointset_forward.1} parent=1 // pred_region
      _
    $region21: #{pointset_forward.1} parent=1 // pred_fallthru
      _
    %576 = vsyncpa [#allocation3], 1

</llo_original>
